<compile_context>
chip_gen: v7x
topology: tpu7x:2x2x1
jax: 0.10.0
libtpu: 0.0.40
codegen_flags: <defaults>
</compile_context>

<pallas_src>
import math

import jax
import jax.numpy as jnp
from jax import lax
from jax.experimental import pallas as pl
from jax.experimental.pallas import tpu as pltpu


def _make_inverted_residual_kernel(H, W, HW, Cin, hid, Cout, bt, use_res,
                                   padl, padded_len, matmul_dtype):
    """Fused kernel for one batch block (stride=1, expand_ratio != 1 path)."""

    def dot_f32(a, b):
        if matmul_dtype != jnp.float32:
            a = a.astype(matmul_dtype)
            b = b.astype(matmul_dtype)
        return jnp.dot(a, b, preferred_element_type=jnp.float32)

    def kernel(x_ref, w1_ref, s1_ref, b1_ref, wdw_ref, s2_ref, b2_ref,
               w3_ref, s3_ref, b3_ref, ml_ref, mr_ref, o_ref, pad_ref):
        # Zero only the scratch halos (the interior is fully overwritten below).
        # Re-done every grid step (cheap: 2*padl lanes) so it stays correct when
        # the "parallel" batch axis is sharded across cores.
        pad_ref[:, 0:padl] = jnp.zeros((hid, padl), jnp.float32)
        pad_ref[:, padl + HW:padded_len] = jnp.zeros(
            (hid, padded_len - padl - HW), jnp.float32)

        w1 = w1_ref[...]            # (hid, Cin)
        w3 = w3_ref[...]            # (Cout, hid)
        wdw = wdw_ref[...]          # (hid, 9), column k = ki*3 + kj
        s1, b1 = s1_ref[...], b1_ref[...]
        s2, b2 = s2_ref[...], b2_ref[...]
        s3, b3 = s3_ref[...], b3_ref[...]
        m_left = ml_ref[...]        # (1, HW): 1 where a dj=-1 neighbor exists
        m_right = mr_ref[...]       # (1, HW): 1 where a dj=+1 neighbor exists

        for b in range(bt):
            x = x_ref[b]                                        # (Cin, HW)

            # ---- 1x1 CDC conv (expand) + BN + ReLU ----
            h1 = dot_f32(w1, x)                                 # (hid, HW)
            h1 = jnp.maximum(h1 * s1 + b1, 0.0)

            # ---- 3x3 depthwise CDC conv (stride=1, pad=1) + BN + ReLU ----
            # Neighbor (i+di, j+dj) of flat pixel p is p + di*W + dj.  Rows out
            # of range land in the zero halo; column wrap-around is cancelled
            # by the precomputed masks (applied once per column group).
            pad_ref[:, padl:padl + HW] = h1

            def column_group(kj):
                acc = None
                for ki in range(3):
                    start = padl + (ki - 1) * W + (kj - 1)      # static offset
                    win = pad_ref[:, start:start + HW]          # (hid, HW)
                    k = ki * 3 + kj
                    tap = wdw[:, k:k + 1]                       # (hid, 1)
                    term = win * tap
                    acc = term if acc is None else acc + term
                return acc

            dw = (column_group(0) * m_left + column_group(1)
                  + column_group(2) * m_right)
            dw = jnp.maximum(dw * s2 + b2, 0.0)

            # ---- 1x1 CDC conv (project) + BN (+ residual) ----
            out = dot_f32(w3, dw)                               # (Cout, HW)
            out = out * s3 + b3
            if use_res:
                out = out + x
            o_ref[b] = out

    return kernel


def inverted_residual_pallas(x_nchw, params, *, stride, expand_ratio, theta,
                             block_batch=None, matmul_dtype=jnp.float32):
    """InvertedResidual forward (expand_ratio != 1 branch), NCHW in/out."""
    N, Cin, H, W = x_nchw.shape
    hid = round(Cin * expand_ratio)
    w1, (g1, be1, m1, v1), wdw, (g2, be2, m2, v2), w3, (g3, be3, m3, v3) = params
    Cout = w3.shape[0]

    # TODO(synk): stride=2 depthwise subsampling and the expand_ratio==1 branch
    # are not implemented in-kernel (would need a strided / non-expanded path).
    assert stride == 1
    assert expand_ratio != 1
    use_res = (stride == 1 and Cin == Cout)

    eps = 1e-5

    def fold_bn(g, b, m, v):
        s = g / jnp.sqrt(v + eps)
        return s.reshape(-1, 1), (b - m * s).reshape(-1, 1)

    # Effective CDC weights — already (C_out_eff, C_in_eff): no transposes for
    # the channel-sublane / HW-lane layout.
    w1_mat = (1.0 - theta) * w1[:, :, 0, 0]                          # (hid, Cin)
    wdw_eff = wdw.at[:, :, 1, 1].add(-theta * wdw.sum(axis=(2, 3)))  # (hid,1,3,3)
    wdw_flat = wdw_eff[:, 0, :, :].reshape(hid, 9)                   # (hid, 9)
    w3_mat = (1.0 - theta) * w3[:, :, 0, 0]                          # (Cout, hid)

    s1, b1 = fold_bn(g1, be1, m1, v1)
    s2, b2 = fold_bn(g2, be2, m2, v2)
    s3, b3 = fold_bn(g3, be3, m3, v3)

    HW = H * W
    # No transpose: NCHW flattens directly into the (C, HW) kernel layout.
    x_flat = x_nchw.reshape(N, Cin, HW)

    # Column-boundary masks for the flattened depthwise conv (host-precomputed).
    col = jnp.arange(HW, dtype=jnp.int32) % W
    m_left = (col >= 1).astype(jnp.float32).reshape(1, HW)
    m_right = (col <= W - 2).astype(jnp.float32).reshape(1, HW)

    # Lane-aligned zero halo on both sides of the flattened spatial axis.
    padl = 128 * ((W + 1 + 127) // 128)
    padded_len = padl + HW + padl

    # Batch block per grid step: amortizes per-step overhead / tiny DMAs while
    # keeping at least 2 grid steps (so "parallel" can shard across cores).
    if block_batch is None:
        bt = 1
        for cand in (8, 4, 2):
            if (N % cand == 0 and N // cand >= 2
                    and cand * HW * max(Cin, hid, Cout) * 4 <= (2 << 20)):
                bt = cand
                break
    else:
        bt = block_batch
    assert N % bt == 0

    kernel = _make_inverted_residual_kernel(
        H, W, HW, Cin, hid, Cout, bt, use_res, padl, padded_len, matmul_dtype)

    def full(shape):
        nd = len(shape)
        return pl.BlockSpec(shape, lambda n, _nd=nd: (0,) * _nd)

    # Rough VMEM budget (double-buffered blocks + scratch + weights), clipped so
    # it stays inside v7x's 64 MiB while leaving headroom on v5e/v6e.
    vmem_est = 4 * (2 * bt * (Cin + Cout) * HW + hid * padded_len
                    + hid * (Cin + 9 + 4) + Cout * (hid + 4) + 2 * HW)
    vmem_limit = int(min(64 * 1024 * 1024, max(32 * 1024 * 1024, 8 * vmem_est)))

    out_flat = pl.pallas_call(
        kernel,
        out_shape=jax.ShapeDtypeStruct((N, Cout, HW), jnp.float32),
        grid_spec=pltpu.PrefetchScalarGridSpec(
            num_scalar_prefetch=0,
            grid=(N // bt,),
            in_specs=[
                pl.BlockSpec((bt, Cin, HW), lambda n: (n, 0, 0)),
                full((hid, Cin)), full((hid, 1)), full((hid, 1)),
                full((hid, 9)), full((hid, 1)), full((hid, 1)),
                full((Cout, hid)), full((Cout, 1)), full((Cout, 1)),
                full((1, HW)), full((1, HW)),
            ],
            out_specs=pl.BlockSpec((bt, Cout, HW), lambda n: (n, 0, 0)),
            scratch_shapes=[pltpu.VMEM((hid, padded_len), jnp.float32)],
        ),
        compiler_params=pltpu.CompilerParams(
            dimension_semantics=("parallel",),
            vmem_limit_bytes=vmem_limit),
    )(x_flat, w1_mat, s1, b1, wdw_flat, s2, b2, w3_mat, s3, b3,
      m_left, m_right)

    return out_flat.reshape(N, Cout, H, W)


# ------------------------- pure-JAX reference (NCHW) -------------------------

def _conv2d_nchw(x, w, stride, padding, groups):
    return lax.conv_general_dilated(
        x, w, (stride, stride), [(padding, padding), (padding, padding)],
        feature_group_count=groups,
        dimension_numbers=("NCHW", "OIHW", "NCHW"))


def _cdc_conv(x, w, stride, padding, groups, theta):
    out_n = _conv2d_nchw(x, w, stride, padding, groups)
    if math.fabs(theta - 0.0) < 1e-8:
        return out_n
    kd = w.sum(axis=(2, 3))[:, :, None, None]
    out_d = _conv2d_nchw(x, kd, stride, 0, groups)
    return out_n - theta * out_d


def _bn(x, g, b, m, v, eps=1e-5):
    g, b, m, v = (t[None, :, None, None] for t in (g, b, m, v))
    return (x - m) / jnp.sqrt(v + eps) * g + b


def inverted_residual_ref(x, params, *, stride, theta):
    w1, (g1, be1, m1, v1), wdw, (g2, be2, m2, v2), w3, (g3, be3, m3, v3) = params
    hid = w1.shape[0]
    h = jax.nn.relu(_bn(_cdc_conv(x, w1, 1, 0, 1, theta), g1, be1, m1, v1))
    h = jax.nn.relu(_bn(_cdc_conv(h, wdw, stride, 1, hid, theta), g2, be2, m2, v2))
    h = _bn(_cdc_conv(h, w3, 1, 0, 1, theta), g3, be3, m3, v3)
    if stride == 1 and x.shape[1] == w3.shape[0]:
        return x + h
    return h


# ---------------------------------- main -------------------------------------

if __name__ == "__main__":
    N, Cin, H, W = 4, 8, 16, 16
    expand_ratio, stride, theta = 2, 1, 0.7
    oup = Cin                      # stride==1 and inp==oup -> residual connection
    hid = round(Cin * expand_ratio)

    key = jax.random.PRNGKey(0)
    ks = jax.random.split(key, 8)
    x = jax.random.normal(ks[0], (N, Cin, H, W), jnp.float32)

    w1 = 0.3 * jax.random.normal(ks[1], (hid, Cin, 1, 1), jnp.float32)
    wdw = 0.3 * jax.random.normal(ks[2], (hid, 1, 3, 3), jnp.float32)
    w3 = 0.3 * jax.random.normal(ks[3], (oup, hid, 1, 1), jnp.float32)

    def bn_params(k, c):
        k1, k2, k3, k4 = jax.random.split(k, 4)
        g = 1.0 + 0.1 * jax.random.normal(k1, (c,), jnp.float32)
        b = 0.1 * jax.random.normal(k2, (c,), jnp.float32)
        m = 0.1 * jax.random.normal(k3, (c,), jnp.float32)
        v = jax.random.uniform(k4, (c,), jnp.float32, minval=0.5, maxval=1.5)
        return g, b, m, v

    params = (w1, bn_params(ks[4], hid), wdw, bn_params(ks[5], hid),
              w3, bn_params(ks[6], oup))

    out = inverted_residual_pallas(
        x, params, stride=stride, expand_ratio=expand_ratio, theta=theta)
    out = jax.block_until_ready(out)

    ref = inverted_residual_ref(x, params, stride=stride, theta=theta)
    assert out.shape == ref.shape, (out.shape, ref.shape)
    err = float(jnp.max(jnp.abs(out - ref)))
    assert err < 1e-3, f"max abs err {err}"
    print("KERNEL_OK")
</pallas_src>

<mosaic_0001>
module attributes {stable_mosaic.version = 11 : i64} {
  func.func @kernel(%arg0: i32, %arg1: memref<2x8x256xf32, #tpu.memory_space<vmem>>, %arg2: memref<16x8xf32, #tpu.memory_space<vmem>>, %arg3: memref<16x1xf32, #tpu.memory_space<vmem>>, %arg4: memref<16x1xf32, #tpu.memory_space<vmem>>, %arg5: memref<16x9xf32, #tpu.memory_space<vmem>>, %arg6: memref<16x1xf32, #tpu.memory_space<vmem>>, %arg7: memref<16x1xf32, #tpu.memory_space<vmem>>, %arg8: memref<8x16xf32, #tpu.memory_space<vmem>>, %arg9: memref<8x1xf32, #tpu.memory_space<vmem>>, %arg10: memref<8x1xf32, #tpu.memory_space<vmem>>, %arg11: memref<1x256xf32, #tpu.memory_space<vmem>>, %arg12: memref<1x256xf32, #tpu.memory_space<vmem>>, %arg13: memref<2x8x256xf32, #tpu.memory_space<vmem>>, %arg14: memref<16x512xf32, #tpu.memory_space<vmem>>) attributes {dimension_semantics = [#tpu.dimension_semantics<parallel>], iteration_bounds = array<i64: 2>, scalar_prefetch = 0 : i64, scratch_operands = 1 : i64, tpu.core_type = #tpu.core_type<tc>, window_params = [{transform_indices = @transform_0, window_bounds = array<i64: 2, 8, 256>}, {pipeline_mode = #tpu.pipeline_mode<synchronous>, transform_indices = @transform_1, window_bounds = array<i64: 16, 8>}, {pipeline_mode = #tpu.pipeline_mode<synchronous>, transform_indices = @transform_2, window_bounds = array<i64: 16, 1>}, {pipeline_mode = #tpu.pipeline_mode<synchronous>, transform_indices = @transform_3, window_bounds = array<i64: 16, 1>}, {pipeline_mode = #tpu.pipeline_mode<synchronous>, transform_indices = @transform_4, window_bounds = array<i64: 16, 9>}, {pipeline_mode = #tpu.pipeline_mode<synchronous>, transform_indices = @transform_5, window_bounds = array<i64: 16, 1>}, {pipeline_mode = #tpu.pipeline_mode<synchronous>, transform_indices = @transform_6, window_bounds = array<i64: 16, 1>}, {pipeline_mode = #tpu.pipeline_mode<synchronous>, transform_indices = @transform_7, window_bounds = array<i64: 8, 16>}, {pipeline_mode = #tpu.pipeline_mode<synchronous>, transform_indices = @transform_8, window_bounds = array<i64: 8, 1>}, {pipeline_mode = #tpu.pipeline_mode<synchronous>, transform_indices = @transform_9, window_bounds = array<i64: 8, 1>}, {pipeline_mode = #tpu.pipeline_mode<synchronous>, transform_indices = @transform_10, window_bounds = array<i64: 1, 256>}, {pipeline_mode = #tpu.pipeline_mode<synchronous>, transform_indices = @transform_11, window_bounds = array<i64: 1, 256>}, {transform_indices = @transform_12, window_bounds = array<i64: 2, 8, 256>}]} {
    %cst = arith.constant 0.000000e+00 : f32
    %0 = vector.broadcast %cst : f32 to vector<16x128xf32>
    %c0 = arith.constant 0 : index
    %c0_0 = arith.constant 0 : index
    %1 = vector.load %arg14[%c0, %c0_0] : memref<16x512xf32, #tpu.memory_space<vmem>>, vector<16x128xf32>
    tpu.vector_store %arg14[%c0, %c0_0], %0 {strides = array<i32>} : memref<16x512xf32, #tpu.memory_space<vmem>>, vector<16x128xf32>,
    %cst_1 = arith.constant 0.000000e+00 : f32
    %2 = vector.broadcast %cst_1 : f32 to vector<16x128xf32>
    %c0_2 = arith.constant 0 : index
    %c384 = arith.constant 384 : index
    %3 = vector.load %arg14[%c0_2, %c384] : memref<16x512xf32, #tpu.memory_space<vmem>>, vector<16x128xf32>
    tpu.vector_store %arg14[%c0_2, %c384], %2 {strides = array<i32>} : memref<16x512xf32, #tpu.memory_space<vmem>>, vector<16x128xf32>,
    %c0_3 = arith.constant 0 : index
    %c0_4 = arith.constant 0 : index
    %4 = vector.load %arg2[%c0_3, %c0_4] : memref<16x8xf32, #tpu.memory_space<vmem>>, vector<16x8xf32>
    %c0_5 = arith.constant 0 : index
    %c0_6 = arith.constant 0 : index
    %5 = vector.load %arg8[%c0_5, %c0_6] : memref<8x16xf32, #tpu.memory_space<vmem>>, vector<8x16xf32>
    %c0_7 = arith.constant 0 : index
    %c0_8 = arith.constant 0 : index
    %6 = vector.load %arg5[%c0_7, %c0_8] : memref<16x9xf32, #tpu.memory_space<vmem>>, vector<16x9xf32>
    %c0_9 = arith.constant 0 : index
    %c0_10 = arith.constant 0 : index
    %7 = vector.load %arg3[%c0_9, %c0_10] : memref<16x1xf32, #tpu.memory_space<vmem>>, vector<16x1xf32>
    %c0_11 = arith.constant 0 : index
    %c0_12 = arith.constant 0 : index
    %8 = vector.load %arg4[%c0_11, %c0_12] : memref<16x1xf32, #tpu.memory_space<vmem>>, vector<16x1xf32>
    %c0_13 = arith.constant 0 : index
    %c0_14 = arith.constant 0 : index
    %9 = vector.load %arg6[%c0_13, %c0_14] : memref<16x1xf32, #tpu.memory_space<vmem>>, vector<16x1xf32>
    %c0_15 = arith.constant 0 : index
    %c0_16 = arith.constant 0 : index
    %10 = vector.load %arg7[%c0_15, %c0_16] : memref<16x1xf32, #tpu.memory_space<vmem>>, vector<16x1xf32>
    %c0_17 = arith.constant 0 : index
    %c0_18 = arith.constant 0 : index
    %11 = vector.load %arg9[%c0_17, %c0_18] : memref<8x1xf32, #tpu.memory_space<vmem>>, vector<8x1xf32>
    %c0_19 = arith.constant 0 : index
    %c0_20 = arith.constant 0 : index
    %12 = vector.load %arg10[%c0_19, %c0_20] : memref<8x1xf32, #tpu.memory_space<vmem>>, vector<8x1xf32>
    %c0_21 = arith.constant 0 : index
    %c0_22 = arith.constant 0 : index
    %13 = vector.load %arg11[%c0_21, %c0_22] : memref<1x256xf32, #tpu.memory_space<vmem>>, vector<1x256xf32>
    %c0_23 = arith.constant 0 : index
    %c0_24 = arith.constant 0 : index
    %14 = vector.load %arg12[%c0_23, %c0_24] : memref<1x256xf32, #tpu.memory_space<vmem>>, vector<1x256xf32>
    %c0_25 = arith.constant 0 : index
    %c0_26 = arith.constant 0 : index
    %c0_27 = arith.constant 0 : index
    %15 = vector.load %arg1[%c0_25, %c0_26, %c0_27] : memref<2x8x256xf32, #tpu.memory_space<vmem>>, vector<1x8x256xf32>
    %16 = vector.shape_cast %15 : vector<1x8x256xf32> to vector<8x256xf32>
    %cst_28 = arith.constant dense<0.000000e+00> : vector<16x256xf32>
    %17 = tpu.matmul %4, %16, %cst_28 {dimension_numbers = #tpu.dot_dimension_numbers<[1], [0], [0], [1], [0, 0, 1, 1], [], []>} : vector<16x8xf32>, vector<8x256xf32>, vector<16x256xf32> -> vector<16x256xf32>
    %18 = vector.broadcast %7 : vector<16x1xf32> to vector<16x256xf32>
    %19 = arith.mulf %17, %18 : vector<16x256xf32>
    %20 = vector.broadcast %8 : vector<16x1xf32> to vector<16x256xf32>
    %21 = arith.addf %19, %20 : vector<16x256xf32>
    %cst_29 = arith.constant 0.000000e+00 : f32
    %22 = vector.broadcast %cst_29 : f32 to vector<16x256xf32>
    %23 = arith.maximumf %21, %22 : vector<16x256xf32>
    %c0_30 = arith.constant 0 : index
    %c128 = arith.constant 128 : index
    %24 = vector.load %arg14[%c0_30, %c128] : memref<16x512xf32, #tpu.memory_space<vmem>>, vector<16x256xf32>
    tpu.vector_store %arg14[%c0_30, %c128], %23 {strides = array<i32>} : memref<16x512xf32, #tpu.memory_space<vmem>>, vector<16x256xf32>,
    %c0_31 = arith.constant 0 : index
    %c111 = arith.constant 111 : index
    %25 = vector.load %arg14[%c0_31, %c111] : memref<16x512xf32, #tpu.memory_space<vmem>>, vector<16x256xf32>
    %26 = vector.extract_strided_slice %6 {offsets = [0, 0], sizes = [16, 1], strides = [1, 1]} : vector<16x9xf32> to vector<16x1xf32>
    %27 = vector.broadcast %26 : vector<16x1xf32> to vector<16x256xf32>
    %28 = arith.mulf %25, %27 : vector<16x256xf32>
    %c0_32 = arith.constant 0 : index
    %c127 = arith.constant 127 : index
    %29 = vector.load %arg14[%c0_32, %c127] : memref<16x512xf32, #tpu.memory_space<vmem>>, vector<16x256xf32>
    %30 = vector.extract_strided_slice %6 {offsets = [0, 3], sizes = [16, 1], strides = [1, 1]} : vector<16x9xf32> to vector<16x1xf32>
    %31 = vector.broadcast %30 : vector<16x1xf32> to vector<16x256xf32>
    %32 = arith.mulf %29, %31 : vector<16x256xf32>
    %33 = arith.addf %28, %32 : vector<16x256xf32>
    %c0_33 = arith.constant 0 : index
    %c143 = arith.constant 143 : index
    %34 = vector.load %arg14[%c0_33, %c143] : memref<16x512xf32, #tpu.memory_space<vmem>>, vector<16x256xf32>
    %35 = vector.extract_strided_slice %6 {offsets = [0, 6], sizes = [16, 1], strides = [1, 1]} : vector<16x9xf32> to vector<16x1xf32>
    %36 = vector.broadcast %35 : vector<16x1xf32> to vector<16x256xf32>
    %37 = arith.mulf %34, %36 : vector<16x256xf32>
    %38 = arith.addf %33, %37 : vector<16x256xf32>
    %39 = vector.broadcast %13 : vector<1x256xf32> to vector<16x256xf32>
    %40 = arith.mulf %38, %39 : vector<16x256xf32>
    %c0_34 = arith.constant 0 : index
    %c112 = arith.constant 112 : index
    %41 = vector.load %arg14[%c0_34, %c112] : memref<16x512xf32, #tpu.memory_space<vmem>>, vector<16x256xf32>
    %42 = vector.extract_strided_slice %6 {offsets = [0, 1], sizes = [16, 1], strides = [1, 1]} : vector<16x9xf32> to vector<16x1xf32>
    %43 = vector.broadcast %42 : vector<16x1xf32> to vector<16x256xf32>
    %44 = arith.mulf %41, %43 : vector<16x256xf32>
    %c0_35 = arith.constant 0 : index
    %c128_36 = arith.constant 128 : index
    %45 = vector.load %arg14[%c0_35, %c128_36] : memref<16x512xf32, #tpu.memory_space<vmem>>, vector<16x256xf32>
    %46 = vector.extract_strided_slice %6 {offsets = [0, 4], sizes = [16, 1], strides = [1, 1]} : vector<16x9xf32> to vector<16x1xf32>
    %47 = vector.broadcast %46 : vector<16x1xf32> to vector<16x256xf32>
    %48 = arith.mulf %45, %47 : vector<16x256xf32>
    %49 = arith.addf %44, %48 : vector<16x256xf32>
    %c0_37 = arith.constant 0 : index
    %c144 = arith.constant 144 : index
    %50 = vector.load %arg14[%c0_37, %c144] : memref<16x512xf32, #tpu.memory_space<vmem>>, vector<16x256xf32>
    %51 = vector.extract_strided_slice %6 {offsets = [0, 7], sizes = [16, 1], strides = [1, 1]} : vector<16x9xf32> to vector<16x1xf32>
    %52 = vector.broadcast %51 : vector<16x1xf32> to vector<16x256xf32>
    %53 = arith.mulf %50, %52 : vector<16x256xf32>
    %54 = arith.addf %49, %53 : vector<16x256xf32>
    %55 = arith.addf %40, %54 : vector<16x256xf32>
    %c0_38 = arith.constant 0 : index
    %c113 = arith.constant 113 : index
    %56 = vector.load %arg14[%c0_38, %c113] : memref<16x512xf32, #tpu.memory_space<vmem>>, vector<16x256xf32>
    %57 = vector.extract_strided_slice %6 {offsets = [0, 2], sizes = [16, 1], strides = [1, 1]} : vector<16x9xf32> to vector<16x1xf32>
    %58 = vector.broadcast %57 : vector<16x1xf32> to vector<16x256xf32>
    %59 = arith.mulf %56, %58 : vector<16x256xf32>
    %c0_39 = arith.constant 0 : index
    %c129 = arith.constant 129 : index
    %60 = vector.load %arg14[%c0_39, %c129] : memref<16x512xf32, #tpu.memory_space<vmem>>, vector<16x256xf32>
    %61 = vector.extract_strided_slice %6 {offsets = [0, 5], sizes = [16, 1], strides = [1, 1]} : vector<16x9xf32> to vector<16x1xf32>
    %62 = vector.broadcast %61 : vector<16x1xf32> to vector<16x256xf32>
    %63 = arith.mulf %60, %62 : vector<16x256xf32>
    %64 = arith.addf %59, %63 : vector<16x256xf32>
    %c0_40 = arith.constant 0 : index
    %c145 = arith.constant 145 : index
    %65 = vector.load %arg14[%c0_40, %c145] : memref<16x512xf32, #tpu.memory_space<vmem>>, vector<16x256xf32>
    %66 = vector.extract_strided_slice %6 {offsets = [0, 8], sizes = [16, 1], strides = [1, 1]} : vector<16x9xf32> to vector<16x1xf32>
    %67 = vector.broadcast %66 : vector<16x1xf32> to vector<16x256xf32>
    %68 = arith.mulf %65, %67 : vector<16x256xf32>
    %69 = arith.addf %64, %68 : vector<16x256xf32>
    %70 = vector.broadcast %14 : vector<1x256xf32> to vector<16x256xf32>
    %71 = arith.mulf %69, %70 : vector<16x256xf32>
    %72 = arith.addf %55, %71 : vector<16x256xf32>
    %73 = vector.broadcast %9 : vector<16x1xf32> to vector<16x256xf32>
    %74 = arith.mulf %72, %73 : vector<16x256xf32>
    %75 = vector.broadcast %10 : vector<16x1xf32> to vector<16x256xf32>
    %76 = arith.addf %74, %75 : vector<16x256xf32>
    %cst_41 = arith.constant 0.000000e+00 : f32
    %77 = vector.broadcast %cst_41 : f32 to vector<16x256xf32>
    %78 = arith.maximumf %76, %77 : vector<16x256xf32>
    %cst_42 = arith.constant dense<0.000000e+00> : vector<8x256xf32>
    %79 = tpu.matmul %5, %78, %cst_42 {dimension_numbers = #tpu.dot_dimension_numbers<[1], [0], [0], [1], [0, 0, 1, 1], [], []>} : vector<8x16xf32>, vector<16x256xf32>, vector<8x256xf32> -> vector<8x256xf32>
    %80 = vector.broadcast %11 : vector<8x1xf32> to vector<8x256xf32>
    %81 = arith.mulf %79, %80 : vector<8x256xf32>
    %82 = vector.broadcast %12 : vector<8x1xf32> to vector<8x256xf32>
    %83 = arith.addf %81, %82 : vector<8x256xf32>
    %84 = arith.addf %83, %16 : vector<8x256xf32>
    %c0_43 = arith.constant 0 : index
    %c0_44 = arith.constant 0 : index
    %c0_45 = arith.constant 0 : index
    %85 = vector.load %arg13[%c0_43, %c0_44, %c0_45] : memref<2x8x256xf32, #tpu.memory_space<vmem>>, vector<1x8x256xf32>
    %86 = vector.shape_cast %85 : vector<1x8x256xf32> to vector<8x256xf32>
    %87 = vector.shape_cast %84 : vector<8x256xf32> to vector<1x8x256xf32>
    tpu.vector_store %arg13[%c0_43, %c0_44, %c0_45], %87 {strides = array<i32>} : memref<2x8x256xf32, #tpu.memory_space<vmem>>, vector<1x8x256xf32>,
    %c1 = arith.constant 1 : index
    %c0_46 = arith.constant 0 : index
    %c0_47 = arith.constant 0 : index
    %88 = vector.load %arg1[%c1, %c0_46, %c0_47] : memref<2x8x256xf32, #tpu.memory_space<vmem>>, vector<1x8x256xf32>
    %89 = vector.shape_cast %88 : vector<1x8x256xf32> to vector<8x256xf32>
    %cst_48 = arith.constant dense<0.000000e+00> : vector<16x256xf32>
    %90 = tpu.matmul %4, %89, %cst_48 {dimension_numbers = #tpu.dot_dimension_numbers<[1], [0], [0], [1], [0, 0, 1, 1], [], []>} : vector<16x8xf32>, vector<8x256xf32>, vector<16x256xf32> -> vector<16x256xf32>
    %91 = vector.broadcast %7 : vector<16x1xf32> to vector<16x256xf32>
    %92 = arith.mulf %90, %91 : vector<16x256xf32>
    %93 = vector.broadcast %8 : vector<16x1xf32> to vector<16x256xf32>
    %94 = arith.addf %92, %93 : vector<16x256xf32>
    %cst_49 = arith.constant 0.000000e+00 : f32
    %95 = vector.broadcast %cst_49 : f32 to vector<16x256xf32>
    %96 = arith.maximumf %94, %95 : vector<16x256xf32>
    %c0_50 = arith.constant 0 : index
    %c128_51 = arith.constant 128 : index
    %97 = vector.load %arg14[%c0_50, %c128_51] : memref<16x512xf32, #tpu.memory_space<vmem>>, vector<16x256xf32>
    tpu.vector_store %arg14[%c0_50, %c128_51], %96 {strides = array<i32>} : memref<16x512xf32, #tpu.memory_space<vmem>>, vector<16x256xf32>,
    %c0_52 = arith.constant 0 : index
    %c111_53 = arith.constant 111 : index
    %98 = vector.load %arg14[%c0_52, %c111_53] : memref<16x512xf32, #tpu.memory_space<vmem>>, vector<16x256xf32>
    %99 = vector.extract_strided_slice %6 {offsets = [0, 0], sizes = [16, 1], strides = [1, 1]} : vector<16x9xf32> to vector<16x1xf32>
    %100 = vector.broadcast %99 : vector<16x1xf32> to vector<16x256xf32>
    %101 = arith.mulf %98, %100 : vector<16x256xf32>
    %c0_54 = arith.constant 0 : index
    %c127_55 = arith.constant 127 : index
    %102 = vector.load %arg14[%c0_54, %c127_55] : memref<16x512xf32, #tpu.memory_space<vmem>>, vector<16x256xf32>
    %103 = vector.extract_strided_slice %6 {offsets = [0, 3], sizes = [16, 1], strides = [1, 1]} : vector<16x9xf32> to vector<16x1xf32>
    %104 = vector.broadcast %103 : vector<16x1xf32> to vector<16x256xf32>
    %105 = arith.mulf %102, %104 : vector<16x256xf32>
    %106 = arith.addf %101, %105 : vector<16x256xf32>
    %c0_56 = arith.constant 0 : index
    %c143_57 = arith.constant 143 : index
    %107 = vector.load %arg14[%c0_56, %c143_57] : memref<16x512xf32, #tpu.memory_space<vmem>>, vector<16x256xf32>
    %108 = vector.extract_strided_slice %6 {offsets = [0, 6], sizes = [16, 1], strides = [1, 1]} : vector<16x9xf32> to vector<16x1xf32>
    %109 = vector.broadcast %108 : vector<16x1xf32> to vector<16x256xf32>
    %110 = arith.mulf %107, %109 : vector<16x256xf32>
    %111 = arith.addf %106, %110 : vector<16x256xf32>
    %112 = vector.broadcast %13 : vector<1x256xf32> to vector<16x256xf32>
    %113 = arith.mulf %111, %112 : vector<16x256xf32>
    %c0_58 = arith.constant 0 : index
    %c112_59 = arith.constant 112 : index
    %114 = vector.load %arg14[%c0_58, %c112_59] : memref<16x512xf32, #tpu.memory_space<vmem>>, vector<16x256xf32>
    %115 = vector.extract_strided_slice %6 {offsets = [0, 1], sizes = [16, 1], strides = [1, 1]} : vector<16x9xf32> to vector<16x1xf32>
    %116 = vector.broadcast %115 : vector<16x1xf32> to vector<16x256xf32>
    %117 = arith.mulf %114, %116 : vector<16x256xf32>
    %c0_60 = arith.constant 0 : index
    %c128_61 = arith.constant 128 : index
    %118 = vector.load %arg14[%c0_60, %c128_61] : memref<16x512xf32, #tpu.memory_space<vmem>>, vector<16x256xf32>
    %119 = vector.extract_strided_slice %6 {offsets = [0, 4], sizes = [16, 1], strides = [1, 1]} : vector<16x9xf32> to vector<16x1xf32>
    %120 = vector.broadcast %119 : vector<16x1xf32> to vector<16x256xf32>
    %121 = arith.mulf %118, %120 : vector<16x256xf32>
    %122 = arith.addf %117, %121 : vector<16x256xf32>
    %c0_62 = arith.constant 0 : index
    %c144_63 = arith.constant 144 : index
    %123 = vector.load %arg14[%c0_62, %c144_63] : memref<16x512xf32, #tpu.memory_space<vmem>>, vector<16x256xf32>
    %124 = vector.extract_strided_slice %6 {offsets = [0, 7], sizes = [16, 1], strides = [1, 1]} : vector<16x9xf32> to vector<16x1xf32>
    %125 = vector.broadcast %124 : vector<16x1xf32> to vector<16x256xf32>
    %126 = arith.mulf %123, %125 : vector<16x256xf32>
    %127 = arith.addf %122, %126 : vector<16x256xf32>
    %128 = arith.addf %113, %127 : vector<16x256xf32>
    %c0_64 = arith.constant 0 : index
    %c113_65 = arith.constant 113 : index
    %129 = vector.load %arg14[%c0_64, %c113_65] : memref<16x512xf32, #tpu.memory_space<vmem>>, vector<16x256xf32>
    %130 = vector.extract_strided_slice %6 {offsets = [0, 2], sizes = [16, 1], strides = [1, 1]} : vector<16x9xf32> to vector<16x1xf32>
    %131 = vector.broadcast %130 : vector<16x1xf32> to vector<16x256xf32>
    %132 = arith.mulf %129, %131 : vector<16x256xf32>
    %c0_66 = arith.constant 0 : index
    %c129_67 = arith.constant 129 : index
    %133 = vector.load %arg14[%c0_66, %c129_67] : memref<16x512xf32, #tpu.memory_space<vmem>>, vector<16x256xf32>
    %134 = vector.extract_strided_slice %6 {offsets = [0, 5], sizes = [16, 1], strides = [1, 1]} : vector<16x9xf32> to vector<16x1xf32>
    %135 = vector.broadcast %134 : vector<16x1xf32> to vector<16x256xf32>
    %136 = arith.mulf %133, %135 : vector<16x256xf32>
    %137 = arith.addf %132, %136 : vector<16x256xf32>
    %c0_68 = arith.constant 0 : index
    %c145_69 = arith.constant 145 : index
    %138 = vector.load %arg14[%c0_68, %c145_69] : memref<16x512xf32, #tpu.memory_space<vmem>>, vector<16x256xf32>
    %139 = vector.extract_strided_slice %6 {offsets = [0, 8], sizes = [16, 1], strides = [1, 1]} : vector<16x9xf32> to vector<16x1xf32>
    %140 = vector.broadcast %139 : vector<16x1xf32> to vector<16x256xf32>
    %141 = arith.mulf %138, %140 : vector<16x256xf32>
    %142 = arith.addf %137, %141 : vector<16x256xf32>
    %143 = vector.broadcast %14 : vector<1x256xf32> to vector<16x256xf32>
    %144 = arith.mulf %142, %143 : vector<16x256xf32>
    %145 = arith.addf %128, %144 : vector<16x256xf32>
    %146 = vector.broadcast %9 : vector<16x1xf32> to vector<16x256xf32>
    %147 = arith.mulf %145, %146 : vector<16x256xf32>
    %148 = vector.broadcast %10 : vector<16x1xf32> to vector<16x256xf32>
    %149 = arith.addf %147, %148 : vector<16x256xf32>
    %cst_70 = arith.constant 0.000000e+00 : f32
    %150 = vector.broadcast %cst_70 : f32 to vector<16x256xf32>
    %151 = arith.maximumf %149, %150 : vector<16x256xf32>
    %cst_71 = arith.constant dense<0.000000e+00> : vector<8x256xf32>
    %152 = tpu.matmul %5, %151, %cst_71 {dimension_numbers = #tpu.dot_dimension_numbers<[1], [0], [0], [1], [0, 0, 1, 1], [], []>} : vector<8x16xf32>, vector<16x256xf32>, vector<8x256xf32> -> vector<8x256xf32>
    %153 = vector.broadcast %11 : vector<8x1xf32> to vector<8x256xf32>
    %154 = arith.mulf %152, %153 : vector<8x256xf32>
    %155 = vector.broadcast %12 : vector<8x1xf32> to vector<8x256xf32>
    %156 = arith.addf %154, %155 : vector<8x256xf32>
    %157 = arith.addf %156, %89 : vector<8x256xf32>
    %c1_72 = arith.constant 1 : index
    %c0_73 = arith.constant 0 : index
    %c0_74 = arith.constant 0 : index
    %158 = vector.load %arg13[%c1_72, %c0_73, %c0_74] : memref<2x8x256xf32, #tpu.memory_space<vmem>>, vector<1x8x256xf32>
    %159 = vector.shape_cast %158 : vector<1x8x256xf32> to vector<8x256xf32>
    %160 = vector.shape_cast %157 : vector<8x256xf32> to vector<1x8x256xf32>
    tpu.vector_store %arg13[%c1_72, %c0_73, %c0_74], %160 {strides = array<i32>} : memref<2x8x256xf32, #tpu.memory_space<vmem>>, vector<1x8x256xf32>,
    return
  }
  func.func @transform_0(%arg0: i32) -> (i32, i32, i32) {
    %c0_i32 = arith.constant 0 : i32
    %c0_i32_0 = arith.constant 0 : i32
    %c0_i32_1 = arith.constant 0 : i32
    return %arg0, %c0_i32, %c0_i32_0 : i32, i32, i32
  }
  func.func @transform_1(%arg0: i32) -> (i32, i32) {
    %c0_i32 = arith.constant 0 : i32
    %c0_i32_0 = arith.constant 0 : i32
    %c0_i32_1 = arith.constant 0 : i32
    return %c0_i32, %c0_i32_0 : i32, i32
  }
  func.func @transform_2(%arg0: i32) -> (i32, i32) {
    %c0_i32 = arith.constant 0 : i32
    %c0_i32_0 = arith.constant 0 : i32
    %c0_i32_1 = arith.constant 0 : i32
    return %c0_i32, %c0_i32_0 : i32, i32
  }
  func.func @transform_3(%arg0: i32) -> (i32, i32) {
    %c0_i32 = arith.constant 0 : i32
    %c0_i32_0 = arith.constant 0 : i32
    %c0_i32_1 = arith.constant 0 : i32
    return %c0_i32, %c0_i32_0 : i32, i32
  }
  func.func @transform_4(%arg0: i32) -> (i32, i32) {
    %c0_i32 = arith.constant 0 : i32
    %c0_i32_0 = arith.constant 0 : i32
    %c0_i32_1 = arith.constant 0 : i32
    return %c0_i32, %c0_i32_0 : i32, i32
  }
  func.func @transform_5(%arg0: i32) -> (i32, i32) {
    %c0_i32 = arith.constant 0 : i32
    %c0_i32_0 = arith.constant 0 : i32
    %c0_i32_1 = arith.constant 0 : i32
    return %c0_i32, %c0_i32_0 : i32, i32
  }
  func.func @transform_6(%arg0: i32) -> (i32, i32) {
    %c0_i32 = arith.constant 0 : i32
    %c0_i32_0 = arith.constant 0 : i32
    %c0_i32_1 = arith.constant 0 : i32
    return %c0_i32, %c0_i32_0 : i32, i32
  }
  func.func @transform_7(%arg0: i32) -> (i32, i32) {
    %c0_i32 = arith.constant 0 : i32
    %c0_i32_0 = arith.constant 0 : i32
    %c0_i32_1 = arith.constant 0 : i32
    return %c0_i32, %c0_i32_0 : i32, i32
  }
  func.func @transform_8(%arg0: i32) -> (i32, i32) {
    %c0_i32 = arith.constant 0 : i32
    %c0_i32_0 = arith.constant 0 : i32
    %c0_i32_1 = arith.constant 0 : i32
    return %c0_i32, %c0_i32_0 : i32, i32
  }
  func.func @transform_9(%arg0: i32) -> (i32, i32) {
    %c0_i32 = arith.constant 0 : i32
    %c0_i32_0 = arith.constant 0 : i32
    %c0_i32_1 = arith.constant 0 : i32
    return %c0_i32, %c0_i32_0 : i32, i32
  }
  func.func @transform_10(%arg0: i32) -> (i32, i32) {
    %c0_i32 = arith.constant 0 : i32
    %c0_i32_0 = arith.constant 0 : i32
    %c0_i32_1 = arith.constant 0 : i32
    return %c0_i32, %c0_i32_0 : i32, i32
  }
  func.func @transform_11(%arg0: i32) -> (i32, i32) {
    %c0_i32 = arith.constant 0 : i32
    %c0_i32_0 = arith.constant 0 : i32
    %c0_i32_1 = arith.constant 0 : i32
    return %c0_i32, %c0_i32_0 : i32, i32
  }
  func.func @transform_12(%arg0: i32) -> (i32, i32, i32) {
    %c0_i32 = arith.constant 0 : i32
    %c0_i32_0 = arith.constant 0 : i32
    %c0_i32_1 = arith.constant 0 : i32
    return %arg0, %c0_i32, %c0_i32_0 : i32, i32, i32
  }
}

</mosaic_0001>

<llo_original>
// kernel: tpu_custom_call.1
$region0: #{tpu_custom_call.1}
  #allocation0 [shape = 'u32[]', space=smem, size = 0x4, offset = 0x4, fixed_abs, tag = 'smem constant byte address 0x4 - core index']
  #allocation1 [shape = 'u32[144,128]{1,0:T(1,128)}', space=vmem, size = 0x12000, scoped, tag = 'internal scratch']
  #allocation2 [shape = 'f32[16,512]{1,0:T(8,128)}', space=vmem, size = 0x8000, scoped, tag = 'scratch operand']
  %s0 = inlined_call_operand.vmem [shape: f32[4,8,256], index: 0, kind: input, shape index: {}]
  %s1 = inlined_call_operand.vmem [shape: f32[16,8], index: 1, kind: input, shape index: {}]
  %s2 = inlined_call_operand.vmem [shape: f32[16,1], index: 2, kind: input, shape index: {}]
  %s3 = inlined_call_operand.vmem [shape: f32[16,1], index: 3, kind: input, shape index: {}]
  %s4 = inlined_call_operand.vmem [shape: f32[16,9], index: 4, kind: input, shape index: {}]
  %s5 = inlined_call_operand.vmem [shape: f32[16,1], index: 5, kind: input, shape index: {}]
  %s6 = inlined_call_operand.vmem [shape: f32[16,1], index: 6, kind: input, shape index: {}]
  %s7 = inlined_call_operand.vmem [shape: f32[8,16], index: 7, kind: input, shape index: {}]
  %s8 = inlined_call_operand.vmem [shape: f32[8,1], index: 8, kind: input, shape index: {}]
  %s9 = inlined_call_operand.vmem [shape: f32[8,1], index: 9, kind: input, shape index: {}]
  %s10 = inlined_call_operand.vmem [shape: f32[1,256], index: 10, kind: input, shape index: {}]
  %s11 = inlined_call_operand.vmem [shape: f32[1,256], index: 11, kind: input, shape index: {}]
  %s12 = inlined_call_operand.hbm [shape: f32[4,8,256], index: 12, kind: output, shape index: {}]
  %s13 = sld [smem:[#allocation0]]
  $region81: #{tpu_custom_call.1} parent=0
    _
  %s15 = ssub.s32 1, %s13
  %s16 = scalar_select 0, %s15, %s13
  $region1: #{tpu_custom_call.1} parent=0
    #allocation3 [shape = 'u8[32768]{0}', space=vmem, size = 0x8000, scoped, tag = 'output window, operand 0']
    #allocation4 [shape = 's32[2]{0}', space=sflag, size = 0x8, scoped, tag = 'scoped memory for tpu_custom_call.1']
    %17 = vsyncpa [#allocation4], 0
    %s18 = scalar_lea.sflag [#allocation4], 1
    %19 = vsyncpa %s18, 0
    loop: start=0, step=1, limit=4
    $region2: #{tpu_custom_call.1} parent=1 // loop_pre_header
      _
    $region3: #{tpu_custom_call.1} parent=1 // loop_header
      %s21 = sphi 0, %s25
      %p22 = scmp.ge.s32.totalorder %s21, 4
      %s31 = sphi 0, %s33
      %s34 = sphi 0, %s31
      %s35 = sphi 0, %s34
      %s51 = sphi 0, %s35
      %s55 = sphi 0, %s55
      %s57 = sphi 0, %s55
      %s58 = sphi 0, %s57
      %s72 = sphi 0, %s58
      %s76 = sphi 0, %s76
      %s78 = sphi 0, %s76
      %s79 = sphi 0, %s78
      %s93 = sphi 0, %s79
      %s97 = sphi 0, %s97
      %s99 = sphi 0, %s97
      %s100 = sphi 0, %s99
      %s114 = sphi 0, %s100
      %s118 = sphi 0, %s118
      %s120 = sphi 0, %s118
      %s121 = sphi 0, %s120
      %s135 = sphi 0, %s121
      %s139 = sphi 0, %s139
      %s141 = sphi 0, %s139
      %s142 = sphi 0, %s141
      %s156 = sphi 0, %s142
      %s160 = sphi 0, %s160
      %s162 = sphi 0, %s160
      %s163 = sphi 0, %s162
      %s177 = sphi 0, %s163
      %s181 = sphi 0, %s181
      %s183 = sphi 0, %s181
      %s184 = sphi 0, %s183
      %s198 = sphi 0, %s184
      %s202 = sphi 0, %s202
      %s204 = sphi 0, %s202
      %s205 = sphi 0, %s204
      %s219 = sphi 0, %s205
      %s223 = sphi 0, %s223
      %s225 = sphi 0, %s223
      %s226 = sphi 0, %s225
      %s240 = sphi 0, %s226
      %s244 = sphi 0, %s244
      %s246 = sphi 0, %s244
      %s247 = sphi 0, %s246
      %s261 = sphi 0, %s247
      %s265 = sphi 0, %s265
      %s267 = sphi 0, %s265
      %s268 = sphi 0, %s267
      %s282 = sphi 0, %s268
      %s288 = sphi 0, %s290
      %s291 = sphi 0, %s288
      %s292 = sphi 0, %s291
      %s308 = sphi 0, %s292
    $region4: #{tpu_custom_call.1} parent=1 // loop_header_branch
      %24 = sbr.rel (%p22) target = $region8
    $region5: #{tpu_custom_call.1} parent=1 // loop_body
      %s26 = ssub.s32 %s21, 1
      %s27 = ssub.s32 %s21, 2
      %s28 = sadd.s32 %s21, 1
      %s29 = ssub.s32 %s21, %s28
      %p30 = scmp.eq.s32.totalorder %s29, 0
      %s32 = sadd.s32 %s31, 1
      %s33 = scalar_select %p30, %s31, %s32
      %p36 = pneg %p30
      %p37 = scmp.eq.s32.totalorder %s21, 1
      %p38 = por %p36, %p37
      %p39 = scmp.ne.s32.totalorder %s31, %s34
      %p40 = scmp.eq.s32.totalorder %s21, 0
      %p41 = por %p39, %p40
      %p42 = scmp.ne.s32.totalorder %s31, %s34
      %p43 = scmp.eq.s32.totalorder %s26, 1
      %p44 = por %p42, %p43
      %p45 = scmp.ne.s32.totalorder %s34, %s35
      %p46 = scmp.eq.s32.totalorder %s26, 0
      %p47 = por %p45, %p46
      %p48 = scmp.ne.s32.totalorder %s34, %s35
      %p49 = scmp.eq.s32.totalorder %s27, 1
      %p50 = por %p48, %p49
      %p52 = scmp.ne.s32.totalorder %s35, %s51
      %p53 = scmp.eq.s32.totalorder %s27, 0
      %p54 = por %p52, %p53
      %s56 = sadd.s32 %s55, 1
      %p59 = scmp.eq.s32.totalorder %s21, 1
      %p60 = scmp.ne.s32.totalorder %s55, %s57
      %p61 = scmp.eq.s32.totalorder %s21, 0
      %p62 = por %p60, %p61
      %p63 = scmp.ne.s32.totalorder %s55, %s57
      %p64 = scmp.eq.s32.totalorder %s26, 1
      %p65 = por %p63, %p64
      %p66 = scmp.ne.s32.totalorder %s57, %s58
      %p67 = scmp.eq.s32.totalorder %s26, 0
      %p68 = por %p66, %p67
      %p69 = scmp.ne.s32.totalorder %s57, %s58
      %p70 = scmp.eq.s32.totalorder %s27, 1
      %p71 = por %p69, %p70
      %p73 = scmp.ne.s32.totalorder %s58, %s72
      %p74 = scmp.eq.s32.totalorder %s27, 0
      %p75 = por %p73, %p74
      %s77 = sadd.s32 %s76, 1
      %p80 = scmp.eq.s32.totalorder %s21, 1
      %p81 = scmp.ne.s32.totalorder %s76, %s78
      %p82 = scmp.eq.s32.totalorder %s21, 0
      %p83 = por %p81, %p82
      %p84 = scmp.ne.s32.totalorder %s76, %s78
      %p85 = scmp.eq.s32.totalorder %s26, 1
      %p86 = por %p84, %p85
      %p87 = scmp.ne.s32.totalorder %s78, %s79
      %p88 = scmp.eq.s32.totalorder %s26, 0
      %p89 = por %p87, %p88
      %p90 = scmp.ne.s32.totalorder %s78, %s79
      %p91 = scmp.eq.s32.totalorder %s27, 1
      %p92 = por %p90, %p91
      %p94 = scmp.ne.s32.totalorder %s79, %s93
      %p95 = scmp.eq.s32.totalorder %s27, 0
      %p96 = por %p94, %p95
      %s98 = sadd.s32 %s97, 1
      %p101 = scmp.eq.s32.totalorder %s21, 1
      %p102 = scmp.ne.s32.totalorder %s97, %s99
      %p103 = scmp.eq.s32.totalorder %s21, 0
      %p104 = por %p102, %p103
      %p105 = scmp.ne.s32.totalorder %s97, %s99
      %p106 = scmp.eq.s32.totalorder %s26, 1
      %p107 = por %p105, %p106
      %p108 = scmp.ne.s32.totalorder %s99, %s100
      %p109 = scmp.eq.s32.totalorder %s26, 0
      %p110 = por %p108, %p109
      %p111 = scmp.ne.s32.totalorder %s99, %s100
      %p112 = scmp.eq.s32.totalorder %s27, 1
      %p113 = por %p111, %p112
      %p115 = scmp.ne.s32.totalorder %s100, %s114
      %p116 = scmp.eq.s32.totalorder %s27, 0
      %p117 = por %p115, %p116
      %s119 = sadd.s32 %s118, 1
      %p122 = scmp.eq.s32.totalorder %s21, 1
      %p123 = scmp.ne.s32.totalorder %s118, %s120
      %p124 = scmp.eq.s32.totalorder %s21, 0
      %p125 = por %p123, %p124
      %p126 = scmp.ne.s32.totalorder %s118, %s120
      %p127 = scmp.eq.s32.totalorder %s26, 1
      %p128 = por %p126, %p127
      %p129 = scmp.ne.s32.totalorder %s120, %s121
      %p130 = scmp.eq.s32.totalorder %s26, 0
      %p131 = por %p129, %p130
      %p132 = scmp.ne.s32.totalorder %s120, %s121
      %p133 = scmp.eq.s32.totalorder %s27, 1
      %p134 = por %p132, %p133
      %p136 = scmp.ne.s32.totalorder %s121, %s135
      %p137 = scmp.eq.s32.totalorder %s27, 0
      %p138 = por %p136, %p137
      %s140 = sadd.s32 %s139, 1
      %p143 = scmp.eq.s32.totalorder %s21, 1
      %p144 = scmp.ne.s32.totalorder %s139, %s141
      %p145 = scmp.eq.s32.totalorder %s21, 0
      %p146 = por %p144, %p145
      %p147 = scmp.ne.s32.totalorder %s139, %s141
      %p148 = scmp.eq.s32.totalorder %s26, 1
      %p149 = por %p147, %p148
      %p150 = scmp.ne.s32.totalorder %s141, %s142
      %p151 = scmp.eq.s32.totalorder %s26, 0
      %p152 = por %p150, %p151
      %p153 = scmp.ne.s32.totalorder %s141, %s142
      %p154 = scmp.eq.s32.totalorder %s27, 1
      %p155 = por %p153, %p154
      %p157 = scmp.ne.s32.totalorder %s142, %s156
      %p158 = scmp.eq.s32.totalorder %s27, 0
      %p159 = por %p157, %p158
      %s161 = sadd.s32 %s160, 1
      %p164 = scmp.eq.s32.totalorder %s21, 1
      %p165 = scmp.ne.s32.totalorder %s160, %s162
      %p166 = scmp.eq.s32.totalorder %s21, 0
      %p167 = por %p165, %p166
      %p168 = scmp.ne.s32.totalorder %s160, %s162
      %p169 = scmp.eq.s32.totalorder %s26, 1
      %p170 = por %p168, %p169
      %p171 = scmp.ne.s32.totalorder %s162, %s163
      %p172 = scmp.eq.s32.totalorder %s26, 0
      %p173 = por %p171, %p172
      %p174 = scmp.ne.s32.totalorder %s162, %s163
      %p175 = scmp.eq.s32.totalorder %s27, 1
      %p176 = por %p174, %p175
      %p178 = scmp.ne.s32.totalorder %s163, %s177
      %p179 = scmp.eq.s32.totalorder %s27, 0
      %p180 = por %p178, %p179
      %s182 = sadd.s32 %s181, 1
      %p185 = scmp.eq.s32.totalorder %s21, 1
      %p186 = scmp.ne.s32.totalorder %s181, %s183
      %p187 = scmp.eq.s32.totalorder %s21, 0
      %p188 = por %p186, %p187
      %p189 = scmp.ne.s32.totalorder %s181, %s183
      %p190 = scmp.eq.s32.totalorder %s26, 1
      %p191 = por %p189, %p190
      %p192 = scmp.ne.s32.totalorder %s183, %s184
      %p193 = scmp.eq.s32.totalorder %s26, 0
      %p194 = por %p192, %p193
      %p195 = scmp.ne.s32.totalorder %s183, %s184
      %p196 = scmp.eq.s32.totalorder %s27, 1
      %p197 = por %p195, %p196
      %p199 = scmp.ne.s32.totalorder %s184, %s198
      %p200 = scmp.eq.s32.totalorder %s27, 0
      %p201 = por %p199, %p200
      %s203 = sadd.s32 %s202, 1
      %p206 = scmp.eq.s32.totalorder %s21, 1
      %p207 = scmp.ne.s32.totalorder %s202, %s204
      %p208 = scmp.eq.s32.totalorder %s21, 0
      %p209 = por %p207, %p208
      %p210 = scmp.ne.s32.totalorder %s202, %s204
      %p211 = scmp.eq.s32.totalorder %s26, 1
      %p212 = por %p210, %p211
      %p213 = scmp.ne.s32.totalorder %s204, %s205
      %p214 = scmp.eq.s32.totalorder %s26, 0
      %p215 = por %p213, %p214
      %p216 = scmp.ne.s32.totalorder %s204, %s205
      %p217 = scmp.eq.s32.totalorder %s27, 1
      %p218 = por %p216, %p217
      %p220 = scmp.ne.s32.totalorder %s205, %s219
      %p221 = scmp.eq.s32.totalorder %s27, 0
      %p222 = por %p220, %p221
      %s224 = sadd.s32 %s223, 1
      %p227 = scmp.eq.s32.totalorder %s21, 1
      %p228 = scmp.ne.s32.totalorder %s223, %s225
      %p229 = scmp.eq.s32.totalorder %s21, 0
      %p230 = por %p228, %p229
      %p231 = scmp.ne.s32.totalorder %s223, %s225
      %p232 = scmp.eq.s32.totalorder %s26, 1
      %p233 = por %p231, %p232
      %p234 = scmp.ne.s32.totalorder %s225, %s226
      %p235 = scmp.eq.s32.totalorder %s26, 0
      %p236 = por %p234, %p235
      %p237 = scmp.ne.s32.totalorder %s225, %s226
      %p238 = scmp.eq.s32.totalorder %s27, 1
      %p239 = por %p237, %p238
      %p241 = scmp.ne.s32.totalorder %s226, %s240
      %p242 = scmp.eq.s32.totalorder %s27, 0
      %p243 = por %p241, %p242
      %s245 = sadd.s32 %s244, 1
      %p248 = scmp.eq.s32.totalorder %s21, 1
      %p249 = scmp.ne.s32.totalorder %s244, %s246
      %p250 = scmp.eq.s32.totalorder %s21, 0
      %p251 = por %p249, %p250
      %p252 = scmp.ne.s32.totalorder %s244, %s246
      %p253 = scmp.eq.s32.totalorder %s26, 1
      %p254 = por %p252, %p253
      %p255 = scmp.ne.s32.totalorder %s246, %s247
      %p256 = scmp.eq.s32.totalorder %s26, 0
      %p257 = por %p255, %p256
      %p258 = scmp.ne.s32.totalorder %s246, %s247
      %p259 = scmp.eq.s32.totalorder %s27, 1
      %p260 = por %p258, %p259
      %p262 = scmp.ne.s32.totalorder %s247, %s261
      %p263 = scmp.eq.s32.totalorder %s27, 0
      %p264 = por %p262, %p263
      %s266 = sadd.s32 %s265, 1
      %p269 = scmp.eq.s32.totalorder %s21, 1
      %p270 = scmp.ne.s32.totalorder %s265, %s267
      %p271 = scmp.eq.s32.totalorder %s21, 0
      %p272 = por %p270, %p271
      %p273 = scmp.ne.s32.totalorder %s265, %s267
      %p274 = scmp.eq.s32.totalorder %s26, 1
      %p275 = por %p273, %p274
      %p276 = scmp.ne.s32.totalorder %s267, %s268
      %p277 = scmp.eq.s32.totalorder %s26, 0
      %p278 = por %p276, %p277
      %p279 = scmp.ne.s32.totalorder %s267, %s268
      %p280 = scmp.eq.s32.totalorder %s27, 1
      %p281 = por %p279, %p280
      %p283 = scmp.ne.s32.totalorder %s268, %s282
      %p284 = scmp.eq.s32.totalorder %s27, 0
      %p285 = por %p283, %p284
      %s286 = ssub.s32 %s21, %s28
      %p287 = scmp.eq.s32.totalorder %s286, 0
      %s289 = sadd.s32 %s288, 1
      %s290 = scalar_select %p287, %s288, %s289
      %p293 = pneg %p287
      %p294 = scmp.eq.s32.totalorder %s21, 1
      %p295 = por %p293, %p294
      %p296 = scmp.ne.s32.totalorder %s288, %s291
      %p297 = scmp.eq.s32.totalorder %s21, 0
      %p298 = por %p296, %p297
      %p299 = scmp.ne.s32.totalorder %s288, %s291
      %p300 = scmp.eq.s32.totalorder %s26, 1
      %p301 = por %p299, %p300
      %p302 = scmp.ne.s32.totalorder %s291, %s292
      %p303 = scmp.eq.s32.totalorder %s26, 0
      %p304 = por %p302, %p303
      %p305 = scmp.ne.s32.totalorder %s291, %s292
      %p306 = scmp.eq.s32.totalorder %s27, 1
      %p307 = por %p305, %p306
      %p309 = scmp.ne.s32.totalorder %s292, %s308
      %p310 = scmp.eq.s32.totalorder %s27, 0
      %p311 = por %p309, %p310
      %p312 = scmp.le.s32.totalorder 1, %s21
      %p313 = scmp.lt.s32.totalorder %s21, 3
      %p314 = pnand %p312, %p313
      %p315 = pneg %p314
      // Predicated region
      $region9: #{tpu_custom_call.1} parent=5 // pred_check
        _
      $region10: #{tpu_custom_call.1} parent=5 // pred_check_branch
        %317 = sbr.rel (%p314) target = $region12
      $region11: #{tpu_custom_call.1} parent=5 // pred_region
        %s318 = ssub.s32 %s21, 1
        // Predicated region
        $region13: #{tpu_custom_call.1} parent=11 // pred_check
          %p319 = pneg %p68
        $region14: #{tpu_custom_call.1} parent=11 // pred_check_branch
          %321 = sbr.rel (%p319) target = $region16
        $region15: #{tpu_custom_call.1} parent=11 // pred_region
          _
        $region16: #{tpu_custom_call.1} parent=11 // pred_fallthru
          _
        // Predicated region
        $region17: #{tpu_custom_call.1} parent=11 // pred_check
          %p322 = pneg %p89
        $region18: #{tpu_custom_call.1} parent=11 // pred_check_branch
          %324 = sbr.rel (%p322) target = $region20
        $region19: #{tpu_custom_call.1} parent=11 // pred_region
          _
        $region20: #{tpu_custom_call.1} parent=11 // pred_fallthru
          _
        // Predicated region
        $region21: #{tpu_custom_call.1} parent=11 // pred_check
          %p325 = pneg %p110
        $region22: #{tpu_custom_call.1} parent=11 // pred_check_branch
          %327 = sbr.rel (%p325) target = $region24
        $region23: #{tpu_custom_call.1} parent=11 // pred_region
          _
        $region24: #{tpu_custom_call.1} parent=11 // pred_fallthru
          _
        // Predicated region
        $region25: #{tpu_custom_call.1} parent=11 // pred_check
          %p328 = pneg %p131
        $region26: #{tpu_custom_call.1} parent=11 // pred_check_branch
          %330 = sbr.rel (%p328) target = $region28
        $region27: #{tpu_custom_call.1} parent=11 // pred_region
          _
        $region28: #{tpu_custom_call.1} parent=11 // pred_fallthru
          _
        // Predicated region
        $region29: #{tpu_custom_call.1} parent=11 // pred_check
          %p331 = pneg %p152
        $region30: #{tpu_custom_call.1} parent=11 // pred_check_branch
          %333 = sbr.rel (%p331) target = $region32
        $region31: #{tpu_custom_call.1} parent=11 // pred_region
          _
        $region32: #{tpu_custom_call.1} parent=11 // pred_fallthru
          _
        // Predicated region
        $region33: #{tpu_custom_call.1} parent=11 // pred_check
          %p334 = pneg %p173
        $region34: #{tpu_custom_call.1} parent=11 // pred_check_branch
          %336 = sbr.rel (%p334) target = $region36
        $region35: #{tpu_custom_call.1} parent=11 // pred_region
          _
        $region36: #{tpu_custom_call.1} parent=11 // pred_fallthru
          _
        // Predicated region
        $region37: #{tpu_custom_call.1} parent=11 // pred_check
          %p337 = pneg %p194
        $region38: #{tpu_custom_call.1} parent=11 // pred_check_branch
          %339 = sbr.rel (%p337) target = $region40
        $region39: #{tpu_custom_call.1} parent=11 // pred_region
          _
        $region40: #{tpu_custom_call.1} parent=11 // pred_fallthru
          _
        // Predicated region
        $region41: #{tpu_custom_call.1} parent=11 // pred_check
          %p340 = pneg %p215
        $region42: #{tpu_custom_call.1} parent=11 // pred_check_branch
          %342 = sbr.rel (%p340) target = $region44
        $region43: #{tpu_custom_call.1} parent=11 // pred_region
          _
        $region44: #{tpu_custom_call.1} parent=11 // pred_fallthru
          _
        // Predicated region
        $region45: #{tpu_custom_call.1} parent=11 // pred_check
          %p343 = pneg %p236
        $region46: #{tpu_custom_call.1} parent=11 // pred_check_branch
          %345 = sbr.rel (%p343) target = $region48
        $region47: #{tpu_custom_call.1} parent=11 // pred_region
          _
        $region48: #{tpu_custom_call.1} parent=11 // pred_fallthru
          _
        // Predicated region
        $region49: #{tpu_custom_call.1} parent=11 // pred_check
          %p346 = pneg %p257
        $region50: #{tpu_custom_call.1} parent=11 // pred_check_branch
          %348 = sbr.rel (%p346) target = $region52
        $region51: #{tpu_custom_call.1} parent=11 // pred_region
          _
        $region52: #{tpu_custom_call.1} parent=11 // pred_fallthru
          _
        // Predicated region
        $region53: #{tpu_custom_call.1} parent=11 // pred_check
          %p349 = pneg %p278
        $region54: #{tpu_custom_call.1} parent=11 // pred_check_branch
          %351 = sbr.rel (%p349) target = $region56
        $region55: #{tpu_custom_call.1} parent=11 // pred_region
          _
        $region56: #{tpu_custom_call.1} parent=11 // pred_fallthru
          _
      $region12: #{tpu_custom_call.1} parent=5 // pred_fallthru
        _
      %p352 = scmp.lt.s32.totalorder %s21, 2
      // Predicated region
      $region57: #{tpu_custom_call.1} parent=5 // pred_check
        %p353 = pneg %p352
      $region58: #{tpu_custom_call.1} parent=5 // pred_check_branch
        %355 = sbr.rel (%p353) target = $region60
      $region59: #{tpu_custom_call.1} parent=5 // pred_region
        // Predicated region
        $region61: #{tpu_custom_call.1} parent=59 // pred_check
          %p356 = pneg %p41
        $region62: #{tpu_custom_call.1} parent=59 // pred_check_branch
          %358 = sbr.rel (%p356) target = $region64
        $region63: #{tpu_custom_call.1} parent=59 // pred_region
          %s359 = smul.u32 2, %s21
          %p360 = scmp.lt.s32.totalorder %s359, 3
          %s361 = scalar_select %p360, %s359, 3
          %s362 = smul.addr %s361, 2
          %s363 = smul.addr %s362, 8
          %s364 = scalar_lea.vmem %s0, %s363
          %s365 = smul.u32 2, %s21
        $region64: #{tpu_custom_call.1} parent=59 // pred_fallthru
          _
      $region60: #{tpu_custom_call.1} parent=5 // pred_fallthru
        _
      %p366 = scmp.le.s32.totalorder 1, %s21
      %p367 = scmp.lt.s32.totalorder %s21, 3
      %p368 = pnand %p366, %p367
      %p369 = pneg %p368
      // Predicated region
      $region65: #{tpu_custom_call.1} parent=5 // pred_check
        _
      $region66: #{tpu_custom_call.1} parent=5 // pred_check_branch
        %371 = sbr.rel (%p368) target = $region68
      $region67: #{tpu_custom_call.1} parent=5 // pred_region
        %s372 = ssub.s32 %s21, 1
        %s373 = smul.u32 2, %s26
        %p374 = scmp.lt.s32.totalorder %s373, 3
        %s375 = scalar_select %p374, %s373, 3
        %s376 = smul.addr %s375, 2
        %s377 = smul.addr %s376, 8
        %s378 = scalar_lea.vmem %s0, %s377
        %p379 = pneg %p47
        %p380 = pneg %p44
        %p381 = pneg %p68
        %p382 = pneg %p65
        %p383 = pneg %p89
        %p384 = pneg %p86
        %p385 = pneg %p110
        %p386 = pneg %p107
        %p387 = pneg %p131
        %p388 = pneg %p128
        %p389 = pneg %p152
        %p390 = pneg %p149
        %p391 = pneg %p173
        %p392 = pneg %p170
        %p393 = pneg %p194
        %p394 = pneg %p191
        %p395 = pneg %p215
        %p396 = pneg %p212
        %p397 = pneg %p236
        %p398 = pneg %p233
        %p399 = pneg %p257
        %p400 = pneg %p254
        %p401 = pneg %p278
        %p402 = pneg %p275
        %p403 = pneg %p304
        %p404 = pneg %p301
        %s405 = sand.u32 %s291, 1
        %s406 = scalar_lea.sflag [#allocation4], %s405
        %s407 = sand.u32 %s291, 1
        %s408 = smul.addr %s407, 32
        %s409 = scalar_lea.vmem [#allocation3], %s408
        %s410 = smul.u32 2, %s26
        %p411 = scmp.lt.s32.totalorder %s410, 3
        %s412 = scalar_select %p411, %s410, 3
        %s413 = smul.addr %s412, 2
        %s414 = smul.addr %s413, 8
        %s415 = scalar_lea.vmem %s0, %s414
        %s416 = smul.u32 2, %s26
        %s417 = smul.u32 2, %s26
        %418 = vst [vmem:[#allocation2] sm:$0xff] 0.0
        %419 = vst [vmem:[#allocation2 + $0x20] sm:$0xff] 0.0
        %420 = vst [vmem:[#allocation2 + $0x18] sm:$0xff] 0.0
        %421 = vst [vmem:[#allocation2 + $0x38] sm:$0xff] 0.0
        %v422 = vld [vmem:[%s1] sm:$0xff]
        %v423 = vld [vmem:[%s1 + $0x8] sm:$0xff]
        %v424 = vld [vmem:[%s7] sm:$0xff]
        %v425 = vld [vmem:[%s4] sm:$0xff]
        %v426 = vld [vmem:[%s4 + $0x8] sm:$0xff]
        %v427 = vld [vmem:[%s2] sm:$0xff]
        %v428 = vld [vmem:[%s2 + $0x8] sm:$0xff]
        %v429 = vld [vmem:[%s3] sm:$0xff]
        %v430 = vld [vmem:[%s3 + $0x8] sm:$0xff]
        %v431 = vld [vmem:[%s5] sm:$0xff]
        %v432 = vld [vmem:[%s5 + $0x8] sm:$0xff]
        %v433 = vld [vmem:[%s6] sm:$0xff]
        %v434 = vld [vmem:[%s6 + $0x8] sm:$0xff]
        %v435 = vld [vmem:[%s8] sm:$0xff]
        %v436 = vld [vmem:[%s9] sm:$0xff]
        %v437 = vld [vmem:[%s10] sm:$0x3]
        %v438 = vld [vmem:[%s11] sm:$0x3]
        %v439 = vld [vmem:[%s415] sm:$0xff]
        %v440 = vld [vmem:[%s415 + $0x8] sm:$0xff]
        %vm441 = vcmask 64512
        %v443 = vsel %vm441, %v422, 0
        %v446 = vsel %vm441, %v423, 0
        %448 = vmatprep.subr.mxu0 %v440
        %449 = vmatpush1.msra.mxu0 %v439
        %450 = vmatprep.subr.mxu0 0.0
        %451 = vmatpush1.msra.mxu0 0.0
        %452 = vmatprep.subr.mxu0 0.0
        %453 = vmatpush1.msra.mxu0 0.0
        %454 = vmatprep.subr.mxu0 0.0
        %455 = vmatpush1.msra.mxu0 0.0
        %456 = vmatprep.subr.mxu0 0.0
        %457 = vmatpush1.msra.mxu0 0.0
        %458 = vmatprep.subr.mxu0 0.0
        %459 = vmatpush1.msra.mxu0 0.0
        %460 = vmatprep.subr.mxu0 0.0
        %461 = vmatpush1.msra.mxu0 0.0
        %462 = vmatprep.subr.mxu0 0.0
        %463 = vmatpush1.msra.mxu0 0.0
        %464 = vmatprep.subr.mxu0 0.0
        %465 = vmatpush1.msra.mxu0 0.0
        %466 = vmatprep.subr.mxu0 0.0
        %467 = vmatpush1.msra.mxu0 0.0
        %468 = vmatprep.subr.mxu0 0.0
        %469 = vmatpush1.msra.mxu0 0.0
        %470 = vmatprep.subr.mxu0 0.0
        %471 = vmatpush1.msra.mxu0 0.0
        %472 = vmatprep.subr.mxu0 0.0
        %473 = vmatpush1.msra.mxu0 0.0
        %474 = vmatprep.subr.mxu0 0.0
        %475 = vmatpush1.msra.mxu0 0.0
        %476 = vmatprep.subr.mxu0 0.0
        %477 = vmatpush1.msra.mxu0 0.0
        %478 = vmatprep.subr.mxu0 0.0
        %479 = vmatpush1.msra.mxu0 0.0
        %480 = vmatprep.subr.mxu0 0.0
        %481 = vmatpush1.msra.mxu0 0.0
        %482 = vmatprep.subr.mxu0 0.0
        %483 = vmatpush1.msra.mxu0 0.0
        %484 = vmatprep.subr.mxu0 0.0
        %485 = vmatpush1.msra.mxu0 0.0
        %486 = vmatprep.subr.mxu0 0.0
        %487 = vmatpush1.msra.mxu0 0.0
        %488 = vmatprep.subr.mxu0 0.0
        %489 = vmatpush1.msra.mxu0 0.0
        %490 = vmatprep.subr.mxu0 0.0
        %491 = vmatpush1.msra.mxu0 0.0
        %492 = vmatprep.subr.mxu0 0.0
        %493 = vmatpush1.msra.mxu0 0.0
        %494 = vmatprep.subr.mxu0 0.0
        %495 = vmatpush1.msra.mxu0 0.0
        %496 = vmatprep.subr.mxu0 0.0
        %497 = vmatpush1.msra.mxu0 0.0
        %498 = vmatprep.subr.mxu0 0.0
        %499 = vmatpush1.msra.mxu0 0.0
        %500 = vmatprep.subr.mxu0 0.0
        %501 = vmatpush1.msra.mxu0 0.0
        %502 = vmatprep.subr.mxu0 0.0
        %503 = vmatpush1.msra.mxu0 0.0
        %504 = vmatprep.subr.mxu0 0.0
        %505 = vmatpush1.msra.mxu0 0.0
        %506 = vmatprep.subr.mxu0 0.0
        %507 = vmatpush1.msra.mxu0 0.0
        %508 = vmatprep.subr.mxu0 0.0
        %509 = vmatpush1.msra.mxu0 0.0
        %510 = vmatprep.subr.mxu0 0.0
        %511 = vmatpush1.msra.mxu0 0.0
        %512 = vmatprep.mubr.f32.mxu0 0.0
        %513 = vmatmul.mubr.f32.gmra.mrb[0].mxu0 %v443
        %v514 = vpop.f32.mrb[0].mxu0
        %v515 = vadd.f32 0.0, %v514
        %v516 = vpop.f32.mrb[0].mxu0
        %v517 = vadd.f32 0.0, %v516
        %518 = vmatprep.mubr.f32.mxu0 0.0
        %519 = vmatmul.mubr.f32.gmra.mrb[0].mxu0 %v446
        %v520 = vpop.f32.mrb[0].mxu0
        %v521 = vadd.f32 0.0, %v520
        %v522 = vpop.f32.mrb[0].mxu0
        %v523 = vadd.f32 0.0, %v522
        %524 = vdwg.mxu0
        %526 = vset.pattern.permute.xlu0 0
        %527 = vperm.xlu0 %526, %v427
        %v528 = vpop.permute.xlu0 %527
        %531 = vset.pattern.permute.xlu0 0
        %532 = vperm.xlu0 %531, %v428
        %v533 = vpop.permute.xlu0 %532
        %v535 = vmul.f32 %v515, %v528
        %v536 = vmul.f32 %v517, %v528
        %v537 = vmul.f32 %v521, %v533
        %v538 = vmul.f32 %v523, %v533
        %540 = vset.pattern.permute.xlu0 0
        %541 = vperm.xlu0 %540, %v429
        %v542 = vpop.permute.xlu0 %541
        %545 = vset.pattern.permute.xlu0 0
        %546 = vperm.xlu0 %545, %v430
        %v547 = vpop.permute.xlu0 %546
        %v549 = vadd.f32 %v535, %v542
        %v550 = vadd.f32 %v536, %v542
        %v551 = vadd.f32 %v537, %v547
        %v552 = vadd.f32 %v538, %v547
        %v553 = vmax.f32 %v549, 0.0
        %v554 = vmax.f32 %v550, 0.0
        %v555 = vmax.f32 %v551, 0.0
        %v556 = vmax.f32 %v552, 0.0
        %557 = vst [vmem:[#allocation2 + $0x8] sm:$0xff] %v553
        %558 = vst [vmem:[#allocation2 + $0x10] sm:$0xff] %v554
        %559 = vst [vmem:[#allocation2 + $0x28] sm:$0xff] %v555
        %560 = vst [vmem:[#allocation2 + $0x30] sm:$0xff] %v556
        %v561 = vld [vmem:[#allocation2] sm:$0xff]
        %v562 = vld [vmem:[#allocation2 + $0x8] sm:$0xff]
        %v563 = vld [vmem:[#allocation2 + $0x10] sm:$0xff]
        %v564 = vld [vmem:[#allocation2 + $0x20] sm:$0xff]
        %v565 = vld [vmem:[#allocation2 + $0x28] sm:$0xff]
        %v566 = vld [vmem:[#allocation2 + $0x30] sm:$0xff]
        %568 = vset.pattern.permute.xlu0 0
        %569 = vperm.xlu0 %568, %v425
        %v570 = vpop.permute.xlu0 %569
        %573 = vset.pattern.permute.xlu0 0
        %574 = vperm.xlu0 %573, %v426
        %v575 = vpop.permute.xlu0 %574
        %v577 = vmul.f32 %v561, %v570
        %v578 = vmul.f32 %v562, %v570
        %v579 = vmul.f32 %v563, %v570
        %v580 = vmul.f32 %v564, %v575
        %v581 = vmul.f32 %v565, %v575
        %v582 = vmul.f32 %v566, %v575
        %583 = vset.pattern.permute.xlu0 3
        %584 = vperm.xlu0 %583, %v425
        %v585 = vpop.permute.xlu0 %584
        %587 = vset.pattern.permute.xlu0 3
        %588 = vperm.xlu0 %587, %v426
        %v589 = vpop.permute.xlu0 %588
        %v591 = vmul.f32 %v561, %v585
        %v592 = vmul.f32 %v562, %v585
        %v593 = vmul.f32 %v563, %v585
        %v594 = vmul.f32 %v564, %v589
        %v595 = vmul.f32 %v565, %v589
        %v596 = vmul.f32 %v566, %v589
        %603 = vrot.lane.b32.xlu0 %v591, 112
        %v604 = vpop.permute.xlu0 %603
        %605 = vrot.lane.b32.xlu0 %v592, 112
        %v606 = vpop.permute.xlu0 %605
        %607 = vrot.lane.b32.xlu0 %v593, 112
        %v608 = vpop.permute.xlu0 %607
        %609 = vrot.lane.b32.xlu0 %v594, 112
        %v610 = vpop.permute.xlu0 %609
        %611 = vrot.lane.b32.xlu0 %v595, 112
        %v612 = vpop.permute.xlu0 %611
        %613 = vrot.lane.b32.xlu0 %v596, 112
        %v614 = vpop.permute.xlu0 %613
        %vm615 = vcmask 916480
        %v616 = vsel %vm615, %v604, %v606
        %v617 = vsel %vm615, %v606, %v608
        %v618 = vsel %vm615, %v610, %v612
        %v619 = vsel %vm615, %v612, %v614
        %v626 = vadd.f32 %v577, %v616
        %v627 = vadd.f32 %v578, %v617
        %v628 = vadd.f32 %v579, %v608
        %v629 = vadd.f32 %v580, %v618
        %v630 = vadd.f32 %v581, %v619
        %v631 = vadd.f32 %v582, %v614
        %v632 = vld [vmem:[#allocation2 + $0x8] sm:$0xff]
        %v633 = vld [vmem:[#allocation2 + $0x10] sm:$0xff]
        %v634 = vld [vmem:[#allocation2 + $0x18] sm:$0xff]
        %v635 = vld [vmem:[#allocation2 + $0x28] sm:$0xff]
        %v636 = vld [vmem:[#allocation2 + $0x30] sm:$0xff]
        %v637 = vld [vmem:[#allocation2 + $0x38] sm:$0xff]
        %638 = vset.pattern.permute.xlu0 6
        %639 = vperm.xlu0 %638, %v425
        %v640 = vpop.permute.xlu0 %639
        %642 = vset.pattern.permute.xlu0 6
        %643 = vperm.xlu0 %642, %v426
        %v644 = vpop.permute.xlu0 %643
        %v646 = vmul.f32 %v632, %v640
        %v647 = vmul.f32 %v633, %v640
        %v648 = vmul.f32 %v634, %v640
        %v649 = vmul.f32 %v635, %v644
        %v650 = vmul.f32 %v636, %v644
        %v651 = vmul.f32 %v637, %v644
        %658 = vrot.lane.b32.xlu0 %v646, 96
        %v659 = vpop.permute.xlu0 %658
        %660 = vrot.lane.b32.xlu0 %v647, 96
        %v661 = vpop.permute.xlu0 %660
        %662 = vrot.lane.b32.xlu0 %v648, 96
        %v663 = vpop.permute.xlu0 %662
        %664 = vrot.lane.b32.xlu0 %v649, 96
        %v665 = vpop.permute.xlu0 %664
        %666 = vrot.lane.b32.xlu0 %v650, 96
        %v667 = vpop.permute.xlu0 %666
        %668 = vrot.lane.b32.xlu0 %v651, 96
        %v669 = vpop.permute.xlu0 %668
        %vm670 = vcmask 785408
        %v671 = vsel %vm670, %v659, %v661
        %v672 = vsel %vm670, %v661, %v663
        %v673 = vsel %vm670, %v665, %v667
        %v674 = vsel %vm670, %v667, %v669
        %v681 = vadd.f32 %v626, %v659
        %v682 = vadd.f32 %v627, %v671
        %v683 = vadd.f32 %v628, %v672
        %v684 = vadd.f32 %v629, %v665
        %v685 = vadd.f32 %v630, %v673
        %v686 = vadd.f32 %v631, %v674
        %v688 = vlaneseq
        %v689 = vshrl.u32 %v688, 7
        %v690 = vsub.s32 0, %v689
        %v691 = vrot.slane %v437, %v690
        %v692 = vlaneseq
        %v693 = vshrl.u32 %v692, 7
        %v694 = vsub.s32 1, %v693
        %v695 = vrot.slane %v437, %v694
        %696 = vrot.lane.b32.xlu0 %v691, 111
        %v697 = vpop.permute.xlu0 %696
        %698 = vrot.lane.b32.xlu0 %v695, 111
        %v699 = vpop.permute.xlu0 %698
        %vm700 = vcmask 908288
        %v701 = vsel %vm700, %v697, %v699
        %v705 = vmul.f32 %v681, %v697
        %v706 = vmul.f32 %v682, %v701
        %v707 = vmul.f32 %v683, %v699
        %v708 = vmul.f32 %v684, %v697
        %v709 = vmul.f32 %v685, %v701
        %v710 = vmul.f32 %v686, %v699
        %711 = vset.pattern.permute.xlu0 1
        %712 = vperm.xlu0 %711, %v425
        %v713 = vpop.permute.xlu0 %712
        %715 = vset.pattern.permute.xlu0 1
        %716 = vperm.xlu0 %715, %v426
        %v717 = vpop.permute.xlu0 %716
        %v719 = vmul.f32 %v561, %v713
        %v720 = vmul.f32 %v562, %v713
        %v721 = vmul.f32 %v563, %v713
        %v722 = vmul.f32 %v564, %v717
        %v723 = vmul.f32 %v565, %v717
        %v724 = vmul.f32 %v566, %v717
        %725 = vset.pattern.permute.xlu0 4
        %726 = vperm.xlu0 %725, %v425
        %v727 = vpop.permute.xlu0 %726
        %729 = vset.pattern.permute.xlu0 4
        %730 = vperm.xlu0 %729, %v426
        %v731 = vpop.permute.xlu0 %730
        %v733 = vmul.f32 %v562, %v727
        %v734 = vmul.f32 %v563, %v727
        %v735 = vmul.f32 %v565, %v731
        %v736 = vmul.f32 %v566, %v731
        %741 = vrot.lane.b32.xlu0 %v733, 112
        %v742 = vpop.permute.xlu0 %741
        %743 = vrot.lane.b32.xlu0 %v734, 112
        %v744 = vpop.permute.xlu0 %743
        %745 = vrot.lane.b32.xlu0 %v735, 112
        %v746 = vpop.permute.xlu0 %745
        %747 = vrot.lane.b32.xlu0 %v736, 112
        %v748 = vpop.permute.xlu0 %747
        %v749 = vsel %vm615, %v742, %v744
        %v750 = vsel %vm615, %v746, %v748
        %v757 = vadd.f32 %v719, %v742
        %v758 = vadd.f32 %v720, %v749
        %v759 = vadd.f32 %v721, %v744
        %v760 = vadd.f32 %v722, %v746
        %v761 = vadd.f32 %v723, %v750
        %v762 = vadd.f32 %v724, %v748
        %763 = vset.pattern.permute.xlu0 7
        %764 = vperm.xlu0 %763, %v425
        %v765 = vpop.permute.xlu0 %764
        %767 = vset.pattern.permute.xlu0 7
        %768 = vperm.xlu0 %767, %v426
        %v769 = vpop.permute.xlu0 %768
        %v771 = vmul.f32 %v632, %v765
        %v772 = vmul.f32 %v633, %v765
        %v773 = vmul.f32 %v634, %v765
        %v774 = vmul.f32 %v635, %v769
        %v775 = vmul.f32 %v636, %v769
        %v776 = vmul.f32 %v637, %v769
        %783 = vrot.lane.b32.xlu0 %v771, 96
        %v784 = vpop.permute.xlu0 %783
        %785 = vrot.lane.b32.xlu0 %v772, 96
        %v786 = vpop.permute.xlu0 %785
        %787 = vrot.lane.b32.xlu0 %v773, 96
        %v788 = vpop.permute.xlu0 %787
        %789 = vrot.lane.b32.xlu0 %v774, 96
        %v790 = vpop.permute.xlu0 %789
        %791 = vrot.lane.b32.xlu0 %v775, 96
        %v792 = vpop.permute.xlu0 %791
        %793 = vrot.lane.b32.xlu0 %v776, 96
        %v794 = vpop.permute.xlu0 %793
        %v795 = vsel %vm670, %v784, %v786
        %v796 = vsel %vm670, %v786, %v788
        %v797 = vsel %vm670, %v790, %v792
        %v798 = vsel %vm670, %v792, %v794
        %v805 = vadd.f32 %v757, %v784
        %v806 = vadd.f32 %v758, %v795
        %v807 = vadd.f32 %v759, %v796
        %v808 = vadd.f32 %v760, %v790
        %v809 = vadd.f32 %v761, %v797
        %v810 = vadd.f32 %v762, %v798
        %817 = vrot.lane.b32.xlu0 %v805, 127
        %v818 = vpop.permute.xlu0 %817
        %819 = vrot.lane.b32.xlu0 %v806, 127
        %v820 = vpop.permute.xlu0 %819
        %821 = vrot.lane.b32.xlu0 %v807, 127
        %v822 = vpop.permute.xlu0 %821
        %823 = vrot.lane.b32.xlu0 %v808, 127
        %v824 = vpop.permute.xlu0 %823
        %825 = vrot.lane.b32.xlu0 %v809, 127
        %v826 = vpop.permute.xlu0 %825
        %827 = vrot.lane.b32.xlu0 %v810, 127
        %v828 = vpop.permute.xlu0 %827
        %vm829 = vcmask 1039360
        %v830 = vsel %vm829, %v818, %v820
        %v831 = vsel %vm829, %v820, %v822
        %v832 = vsel %vm829, %v824, %v826
        %v833 = vsel %vm829, %v826, %v828
        %v840 = vadd.f32 %v705, %v830
        %v841 = vadd.f32 %v706, %v831
        %v842 = vadd.f32 %v707, %v822
        %v843 = vadd.f32 %v708, %v832
        %v844 = vadd.f32 %v709, %v833
        %v845 = vadd.f32 %v710, %v828
        %846 = vset.pattern.permute.xlu0 2
        %847 = vperm.xlu0 %846, %v425
        %v848 = vpop.permute.xlu0 %847
        %850 = vset.pattern.permute.xlu0 2
        %851 = vperm.xlu0 %850, %v426
        %v852 = vpop.permute.xlu0 %851
        %v854 = vmul.f32 %v561, %v848
        %v855 = vmul.f32 %v562, %v848
        %v856 = vmul.f32 %v563, %v848
        %v857 = vmul.f32 %v564, %v852
        %v858 = vmul.f32 %v565, %v852
        %v859 = vmul.f32 %v566, %v852
        %860 = vset.pattern.permute.xlu0 5
        %861 = vperm.xlu0 %860, %v425
        %v862 = vpop.permute.xlu0 %861
        %864 = vset.pattern.permute.xlu0 5
        %865 = vperm.xlu0 %864, %v426
        %v866 = vpop.permute.xlu0 %865
        %v868 = vmul.f32 %v632, %v862
        %v869 = vmul.f32 %v633, %v862
        %v870 = vmul.f32 %v634, %v862
        %v871 = vmul.f32 %v635, %v866
        %v872 = vmul.f32 %v636, %v866
        %v873 = vmul.f32 %v637, %v866
        %880 = vrot.lane.b32.xlu0 %v868, 112
        %v881 = vpop.permute.xlu0 %880
        %882 = vrot.lane.b32.xlu0 %v869, 112
        %v883 = vpop.permute.xlu0 %882
        %884 = vrot.lane.b32.xlu0 %v870, 112
        %v885 = vpop.permute.xlu0 %884
        %886 = vrot.lane.b32.xlu0 %v871, 112
        %v887 = vpop.permute.xlu0 %886
        %888 = vrot.lane.b32.xlu0 %v872, 112
        %v889 = vpop.permute.xlu0 %888
        %890 = vrot.lane.b32.xlu0 %v873, 112
        %v891 = vpop.permute.xlu0 %890
        %v892 = vsel %vm615, %v881, %v883
        %v893 = vsel %vm615, %v883, %v885
        %v894 = vsel %vm615, %v887, %v889
        %v895 = vsel %vm615, %v889, %v891
        %v902 = vadd.f32 %v854, %v881
        %v903 = vadd.f32 %v855, %v892
        %v904 = vadd.f32 %v856, %v893
        %v905 = vadd.f32 %v857, %v887
        %v906 = vadd.f32 %v858, %v894
        %v907 = vadd.f32 %v859, %v895
        %908 = vset.pattern.permute.xlu0 8
        %909 = vperm.xlu0 %908, %v425
        %v910 = vpop.permute.xlu0 %909
        %912 = vset.pattern.permute.xlu0 8
        %913 = vperm.xlu0 %912, %v426
        %v914 = vpop.permute.xlu0 %913
        %v916 = vmul.f32 %v632, %v910
        %v917 = vmul.f32 %v633, %v910
        %v918 = vmul.f32 %v634, %v910
        %v919 = vmul.f32 %v635, %v914
        %v920 = vmul.f32 %v636, %v914
        %v921 = vmul.f32 %v637, %v914
        %928 = vrot.lane.b32.xlu0 %v916, 96
        %v929 = vpop.permute.xlu0 %928
        %930 = vrot.lane.b32.xlu0 %v917, 96
        %v931 = vpop.permute.xlu0 %930
        %932 = vrot.lane.b32.xlu0 %v918, 96
        %v933 = vpop.permute.xlu0 %932
        %934 = vrot.lane.b32.xlu0 %v919, 96
        %v935 = vpop.permute.xlu0 %934
        %936 = vrot.lane.b32.xlu0 %v920, 96
        %v937 = vpop.permute.xlu0 %936
        %938 = vrot.lane.b32.xlu0 %v921, 96
        %v939 = vpop.permute.xlu0 %938
        %v940 = vsel %vm670, %v929, %v931
        %v941 = vsel %vm670, %v931, %v933
        %v942 = vsel %vm670, %v935, %v937
        %v943 = vsel %vm670, %v937, %v939
        %v950 = vadd.f32 %v902, %v929
        %v951 = vadd.f32 %v903, %v940
        %v952 = vadd.f32 %v904, %v941
        %v953 = vadd.f32 %v905, %v935
        %v954 = vadd.f32 %v906, %v942
        %v955 = vadd.f32 %v907, %v943
        %v957 = vlaneseq
        %v958 = vshrl.u32 %v957, 7
        %v959 = vsub.s32 0, %v958
        %v960 = vrot.slane %v438, %v959
        %v961 = vlaneseq
        %v962 = vshrl.u32 %v961, 7
        %v963 = vsub.s32 1, %v962
        %v964 = vrot.slane %v438, %v963
        %965 = vrot.lane.b32.xlu0 %v960, 113
        %v966 = vpop.permute.xlu0 %965
        %967 = vrot.lane.b32.xlu0 %v964, 113
        %v968 = vpop.permute.xlu0 %967
        %vm969 = vcmask 924672
        %v970 = vsel %vm969, %v966, %v968
        %v974 = vmul.f32 %v950, %v966
        %v975 = vmul.f32 %v951, %v970
        %v976 = vmul.f32 %v952, %v968
        %v977 = vmul.f32 %v953, %v966
        %v978 = vmul.f32 %v954, %v970
        %v979 = vmul.f32 %v955, %v968
        %986 = vrot.lane.b32.xlu0 %v974, 126
        %v987 = vpop.permute.xlu0 %986
        %988 = vrot.lane.b32.xlu0 %v975, 126
        %v989 = vpop.permute.xlu0 %988
        %990 = vrot.lane.b32.xlu0 %v976, 126
        %v991 = vpop.permute.xlu0 %990
        %992 = vrot.lane.b32.xlu0 %v977, 126
        %v993 = vpop.permute.xlu0 %992
        %994 = vrot.lane.b32.xlu0 %v978, 126
        %v995 = vpop.permute.xlu0 %994
        %996 = vrot.lane.b32.xlu0 %v979, 126
        %v997 = vpop.permute.xlu0 %996
        %vm998 = vcmask 1031168
        %v999 = vsel %vm998, %v987, %v989
        %v1000 = vsel %vm998, %v989, %v991
        %v1001 = vsel %vm998, %v993, %v995
        %v1002 = vsel %vm998, %v995, %v997
        %v1009 = vadd.f32 %v840, %v999
        %v1010 = vadd.f32 %v841, %v1000
        %v1011 = vadd.f32 %v842, %v991
        %v1012 = vadd.f32 %v843, %v1001
        %v1013 = vadd.f32 %v844, %v1002
        %v1014 = vadd.f32 %v845, %v997
        %1016 = vset.pattern.permute.xlu0 0
        %1017 = vperm.xlu0 %1016, %v431
        %v1018 = vpop.permute.xlu0 %1017
        %1021 = vset.pattern.permute.xlu0 0
        %1022 = vperm.xlu0 %1021, %v432
        %v1023 = vpop.permute.xlu0 %1022
        %v1025 = vmul.f32 %v1009, %v1018
        %v1026 = vmul.f32 %v1010, %v1018
        %v1027 = vmul.f32 %v1011, %v1018
        %v1028 = vmul.f32 %v1012, %v1023
        %v1029 = vmul.f32 %v1013, %v1023
        %v1030 = vmul.f32 %v1014, %v1023
        %1032 = vset.pattern.permute.xlu0 0
        %1033 = vperm.xlu0 %1032, %v433
        %v1034 = vpop.permute.xlu0 %1033
        %1037 = vset.pattern.permute.xlu0 0
        %1038 = vperm.xlu0 %1037, %v434
        %v1039 = vpop.permute.xlu0 %1038
        %v1041 = vadd.f32 %v1025, %v1034
        %v1042 = vadd.f32 %v1026, %v1034
        %v1043 = vadd.f32 %v1027, %v1034
        %v1044 = vadd.f32 %v1028, %v1039
        %v1045 = vadd.f32 %v1029, %v1039
        %v1046 = vadd.f32 %v1030, %v1039
        %v1047 = vmax.f32 %v1041, 0.0
        %v1048 = vmax.f32 %v1042, 0.0
        %v1049 = vmax.f32 %v1043, 0.0
        %v1050 = vmax.f32 %v1044, 0.0
        %v1051 = vmax.f32 %v1045, 0.0
        %v1052 = vmax.f32 %v1046, 0.0
        %1059 = vrot.lane.b32.xlu0 %v1047, 17
        %v1060 = vpop.permute.xlu0 %1059
        %1061 = vrot.lane.b32.xlu0 %v1048, 17
        %v1062 = vpop.permute.xlu0 %1061
        %1063 = vrot.lane.b32.xlu0 %v1049, 17
        %v1064 = vpop.permute.xlu0 %1063
        %1065 = vrot.lane.b32.xlu0 %v1050, 17
        %v1066 = vpop.permute.xlu0 %1065
        %1067 = vrot.lane.b32.xlu0 %v1051, 17
        %v1068 = vpop.permute.xlu0 %1067
        %1069 = vrot.lane.b32.xlu0 %v1052, 17
        %v1070 = vpop.permute.xlu0 %1069
        %vm1071 = vcmask 138240
        %v1072 = vsel %vm1071, %v1060, %v1062
        %v1073 = vsel %vm1071, %v1062, %v1064
        %v1074 = vsel %vm1071, %v1066, %v1068
        %v1075 = vsel %vm1071, %v1068, %v1070
        %vm1080 = vcmask 130048
        %v1082 = vsel %vm1080, %v424, 0
        %1084 = vmatprep.subr.mxu0 %v1073
        %1085 = vmatpush1.msra.mxu0 %v1072
        %1086 = vmatprep.subr.mxu0 %v1075
        %1087 = vmatpush1.msra.mxu0 %v1074
        %1088 = vmatprep.subr.mxu0 0.0
        %1089 = vmatpush1.msra.mxu0 0.0
        %1090 = vmatprep.subr.mxu0 0.0
        %1091 = vmatpush1.msra.mxu0 0.0
        %1092 = vmatprep.subr.mxu0 0.0
        %1093 = vmatpush1.msra.mxu0 0.0
        %1094 = vmatprep.subr.mxu0 0.0
        %1095 = vmatpush1.msra.mxu0 0.0
        %1096 = vmatprep.subr.mxu0 0.0
        %1097 = vmatpush1.msra.mxu0 0.0
        %1098 = vmatprep.subr.mxu0 0.0
        %1099 = vmatpush1.msra.mxu0 0.0
        %1100 = vmatprep.subr.mxu0 0.0
        %1101 = vmatpush1.msra.mxu0 0.0
        %1102 = vmatprep.subr.mxu0 0.0
        %1103 = vmatpush1.msra.mxu0 0.0
        %1104 = vmatprep.subr.mxu0 0.0
        %1105 = vmatpush1.msra.mxu0 0.0
        %1106 = vmatprep.subr.mxu0 0.0
        %1107 = vmatpush1.msra.mxu0 0.0
        %1108 = vmatprep.subr.mxu0 0.0
        %1109 = vmatpush1.msra.mxu0 0.0
        %1110 = vmatprep.subr.mxu0 0.0
        %1111 = vmatpush1.msra.mxu0 0.0
        %1112 = vmatprep.subr.mxu0 0.0
        %1113 = vmatpush1.msra.mxu0 0.0
        %1114 = vmatprep.subr.mxu0 0.0
        %1115 = vmatpush1.msra.mxu0 0.0
        %1116 = vmatprep.subr.mxu0 0.0
        %1117 = vmatpush1.msra.mxu0 0.0
        %1118 = vmatprep.subr.mxu0 0.0
        %1119 = vmatpush1.msra.mxu0 0.0
        %1120 = vmatprep.subr.mxu0 0.0
        %1121 = vmatpush1.msra.mxu0 0.0
        %1122 = vmatprep.subr.mxu0 0.0
        %1123 = vmatpush1.msra.mxu0 0.0
        %1124 = vmatprep.subr.mxu0 0.0
        %1125 = vmatpush1.msra.mxu0 0.0
        %1126 = vmatprep.subr.mxu0 0.0
        %1127 = vmatpush1.msra.mxu0 0.0
        %1128 = vmatprep.subr.mxu0 0.0
        %1129 = vmatpush1.msra.mxu0 0.0
        %1130 = vmatprep.subr.mxu0 0.0
        %1131 = vmatpush1.msra.mxu0 0.0
        %1132 = vmatprep.subr.mxu0 0.0
        %1133 = vmatpush1.msra.mxu0 0.0
        %1134 = vmatprep.subr.mxu0 0.0
        %1135 = vmatpush1.msra.mxu0 0.0
        %1136 = vmatprep.subr.mxu0 0.0
        %1137 = vmatpush1.msra.mxu0 0.0
        %1138 = vmatprep.subr.mxu0 0.0
        %1139 = vmatpush1.msra.mxu0 0.0
        %1140 = vmatprep.subr.mxu0 0.0
        %1141 = vmatpush1.msra.mxu0 0.0
        %1142 = vmatprep.subr.mxu0 0.0
        %1143 = vmatpush1.msra.mxu0 0.0
        %1144 = vmatprep.subr.mxu0 0.0
        %1145 = vmatpush1.msra.mxu0 0.0
        %1146 = vmatprep.subr.mxu0 0.0
        %1147 = vmatpush1.msra.mxu0 0.0
        %1148 = vmatprep.mubr.f32.mxu0 0.0
        %1149 = vmatmul.mubr.f32.gmra.mrb[0].mxu0 %v1082
        %v1150 = vpop.f32.mrb[0].mxu0
        %v1151 = vadd.f32 0.0, %v1150
        %v1152 = vpop.f32.mrb[0].mxu0
        %v1153 = vadd.f32 0.0, %v1152
        %1154 = vdwg.mxu0
        %1156 = vset.pattern.permute.xlu0 0
        %1157 = vperm.xlu0 %1156, %v435
        %v1158 = vpop.permute.xlu0 %1157
        %v1160 = vmul.f32 %v1151, %v1158
        %v1161 = vmul.f32 %v1153, %v1158
        %1163 = vset.pattern.permute.xlu0 0
        %1164 = vperm.xlu0 %1163, %v436
        %v1165 = vpop.permute.xlu0 %1164
        %v1167 = vadd.f32 %v1160, %v1165
        %v1168 = vadd.f32 %v1161, %v1165
        %v1169 = vadd.f32 %v1167, %v439
        %v1170 = vadd.f32 %v1168, %v440
        %1171 = vst [vmem:[%s409] sm:$0xff] %v1169
        %1172 = vst [vmem:[%s409 + $0x8] sm:$0xff] %v1170
        %s1173 = scalar_lea.vmem %s415, 16
        %v1174 = vld [vmem:[%s1173] sm:$0xff]
        %v1175 = vld [vmem:[%s1173 + $0x8] sm:$0xff]
        %1176 = vmatprep.subr.mxu0 %v1175
        %1177 = vmatpush1.msra.mxu0 %v1174
        %1178 = vmatprep.subr.mxu0 0.0
        %1179 = vmatpush1.msra.mxu0 0.0
        %1180 = vmatprep.subr.mxu0 0.0
        %1181 = vmatpush1.msra.mxu0 0.0
        %1182 = vmatprep.subr.mxu0 0.0
        %1183 = vmatpush1.msra.mxu0 0.0
        %1184 = vmatprep.subr.mxu0 0.0
        %1185 = vmatpush1.msra.mxu0 0.0
        %1186 = vmatprep.subr.mxu0 0.0
        %1187 = vmatpush1.msra.mxu0 0.0
        %1188 = vmatprep.subr.mxu0 0.0
        %1189 = vmatpush1.msra.mxu0 0.0
        %1190 = vmatprep.subr.mxu0 0.0
        %1191 = vmatpush1.msra.mxu0 0.0
        %1192 = vmatprep.subr.mxu0 0.0
        %1193 = vmatpush1.msra.mxu0 0.0
        %1194 = vmatprep.subr.mxu0 0.0
        %1195 = vmatpush1.msra.mxu0 0.0
        %1196 = vmatprep.subr.mxu0 0.0
        %1197 = vmatpush1.msra.mxu0 0.0
        %1198 = vmatprep.subr.mxu0 0.0
        %1199 = vmatpush1.msra.mxu0 0.0
        %1200 = vmatprep.subr.mxu0 0.0
        %1201 = vmatpush1.msra.mxu0 0.0
        %1202 = vmatprep.subr.mxu0 0.0
        %1203 = vmatpush1.msra.mxu0 0.0
        %1204 = vmatprep.subr.mxu0 0.0
        %1205 = vmatpush1.msra.mxu0 0.0
        %1206 = vmatprep.subr.mxu0 0.0
        %1207 = vmatpush1.msra.mxu0 0.0
        %1208 = vmatprep.subr.mxu0 0.0
        %1209 = vmatpush1.msra.mxu0 0.0
        %1210 = vmatprep.subr.mxu0 0.0
        %1211 = vmatpush1.msra.mxu0 0.0
        %1212 = vmatprep.subr.mxu0 0.0
        %1213 = vmatpush1.msra.mxu0 0.0
        %1214 = vmatprep.subr.mxu0 0.0
        %1215 = vmatpush1.msra.mxu0 0.0
        %1216 = vmatprep.subr.mxu0 0.0
        %1217 = vmatpush1.msra.mxu0 0.0
        %1218 = vmatprep.subr.mxu0 0.0
        %1219 = vmatpush1.msra.mxu0 0.0
        %1220 = vmatprep.subr.mxu0 0.0
        %1221 = vmatpush1.msra.mxu0 0.0
        %1222 = vmatprep.subr.mxu0 0.0
        %1223 = vmatpush1.msra.mxu0 0.0
        %1224 = vmatprep.subr.mxu0 0.0
        %1225 = vmatpush1.msra.mxu0 0.0
        %1226 = vmatprep.subr.mxu0 0.0
        %1227 = vmatpush1.msra.mxu0 0.0
        %1228 = vmatprep.subr.mxu0 0.0
        %1229 = vmatpush1.msra.mxu0 0.0
        %1230 = vmatprep.subr.mxu0 0.0
        %1231 = vmatpush1.msra.mxu0 0.0
        %1232 = vmatprep.subr.mxu0 0.0
        %1233 = vmatpush1.msra.mxu0 0.0
        %1234 = vmatprep.subr.mxu0 0.0
        %1235 = vmatpush1.msra.mxu0 0.0
        %1236 = vmatprep.subr.mxu0 0.0
        %1237 = vmatpush1.msra.mxu0 0.0
        %1238 = vmatprep.subr.mxu0 0.0
        %1239 = vmatpush1.msra.mxu0 0.0
        %1240 = vmatprep.mubr.f32.mxu0 0.0
        %1241 = vmatmul.mubr.f32.gmra.mrb[0].mxu0 %v443
        %v1242 = vpop.f32.mrb[0].mxu0
        %v1243 = vadd.f32 0.0, %v1242
        %v1244 = vpop.f32.mrb[0].mxu0
        %v1245 = vadd.f32 0.0, %v1244
        %1246 = vmatprep.mubr.f32.mxu0 0.0
        %1247 = vmatmul.mubr.f32.gmra.mrb[0].mxu0 %v446
        %v1248 = vpop.f32.mrb[0].mxu0
        %v1249 = vadd.f32 0.0, %v1248
        %v1250 = vpop.f32.mrb[0].mxu0
        %v1251 = vadd.f32 0.0, %v1250
        %1252 = vdwg.mxu0
        %v1253 = vmul.f32 %v1243, %v528
        %v1254 = vmul.f32 %v1245, %v528
        %v1255 = vmul.f32 %v1249, %v533
        %v1256 = vmul.f32 %v1251, %v533
        %v1257 = vadd.f32 %v1253, %v542
        %v1258 = vadd.f32 %v1254, %v542
        %v1259 = vadd.f32 %v1255, %v547
        %v1260 = vadd.f32 %v1256, %v547
        %v1261 = vmax.f32 %v1257, 0.0
        %v1262 = vmax.f32 %v1258, 0.0
        %v1263 = vmax.f32 %v1259, 0.0
        %v1264 = vmax.f32 %v1260, 0.0
        %1265 = vst [vmem:[#allocation2 + $0x8] sm:$0xff] %v1261
        %1266 = vst [vmem:[#allocation2 + $0x10] sm:$0xff] %v1262
        %1267 = vst [vmem:[#allocation2 + $0x28] sm:$0xff] %v1263
        %1268 = vst [vmem:[#allocation2 + $0x30] sm:$0xff] %v1264
        %v1269 = vld [vmem:[#allocation2] sm:$0xff]
        %v1270 = vld [vmem:[#allocation2 + $0x8] sm:$0xff]
        %v1271 = vld [vmem:[#allocation2 + $0x10] sm:$0xff]
        %v1272 = vld [vmem:[#allocation2 + $0x20] sm:$0xff]
        %v1273 = vld [vmem:[#allocation2 + $0x28] sm:$0xff]
        %v1274 = vld [vmem:[#allocation2 + $0x30] sm:$0xff]
        %v1275 = vmul.f32 %v1269, %v570
        %v1276 = vmul.f32 %v1270, %v570
        %v1277 = vmul.f32 %v1271, %v570
        %v1278 = vmul.f32 %v1272, %v575
        %v1279 = vmul.f32 %v1273, %v575
        %v1280 = vmul.f32 %v1274, %v575
        %v1281 = vmul.f32 %v1269, %v585
        %v1282 = vmul.f32 %v1270, %v585
        %v1283 = vmul.f32 %v1271, %v585
        %v1284 = vmul.f32 %v1272, %v589
        %v1285 = vmul.f32 %v1273, %v589
        %v1286 = vmul.f32 %v1274, %v589
        %1293 = vrot.lane.b32.xlu0 %v1281, 112
        %v1294 = vpop.permute.xlu0 %1293
        %1295 = vrot.lane.b32.xlu0 %v1282, 112
        %v1296 = vpop.permute.xlu0 %1295
        %1297 = vrot.lane.b32.xlu0 %v1283, 112
        %v1298 = vpop.permute.xlu0 %1297
        %1299 = vrot.lane.b32.xlu0 %v1284, 112
        %v1300 = vpop.permute.xlu0 %1299
        %1301 = vrot.lane.b32.xlu0 %v1285, 112
        %v1302 = vpop.permute.xlu0 %1301
        %1303 = vrot.lane.b32.xlu0 %v1286, 112
        %v1304 = vpop.permute.xlu0 %1303
        %v1305 = vsel %vm615, %v1294, %v1296
        %v1306 = vsel %vm615, %v1296, %v1298
        %v1307 = vsel %vm615, %v1300, %v1302
        %v1308 = vsel %vm615, %v1302, %v1304
        %v1315 = vadd.f32 %v1275, %v1305
        %v1316 = vadd.f32 %v1276, %v1306
        %v1317 = vadd.f32 %v1277, %v1298
        %v1318 = vadd.f32 %v1278, %v1307
        %v1319 = vadd.f32 %v1279, %v1308
        %v1320 = vadd.f32 %v1280, %v1304
        %v1321 = vld [vmem:[#allocation2 + $0x8] sm:$0xff]
        %v1322 = vld [vmem:[#allocation2 + $0x10] sm:$0xff]
        %v1323 = vld [vmem:[#allocation2 + $0x18] sm:$0xff]
        %v1324 = vld [vmem:[#allocation2 + $0x28] sm:$0xff]
        %v1325 = vld [vmem:[#allocation2 + $0x30] sm:$0xff]
        %v1326 = vld [vmem:[#allocation2 + $0x38] sm:$0xff]
        %v1327 = vmul.f32 %v1321, %v640
        %v1328 = vmul.f32 %v1322, %v640
        %v1329 = vmul.f32 %v1323, %v640
        %v1330 = vmul.f32 %v1324, %v644
        %v1331 = vmul.f32 %v1325, %v644
        %v1332 = vmul.f32 %v1326, %v644
        %1339 = vrot.lane.b32.xlu0 %v1327, 96
        %v1340 = vpop.permute.xlu0 %1339
        %1341 = vrot.lane.b32.xlu0 %v1328, 96
        %v1342 = vpop.permute.xlu0 %1341
        %1343 = vrot.lane.b32.xlu0 %v1329, 96
        %v1344 = vpop.permute.xlu0 %1343
        %1345 = vrot.lane.b32.xlu0 %v1330, 96
        %v1346 = vpop.permute.xlu0 %1345
        %1347 = vrot.lane.b32.xlu0 %v1331, 96
        %v1348 = vpop.permute.xlu0 %1347
        %1349 = vrot.lane.b32.xlu0 %v1332, 96
        %v1350 = vpop.permute.xlu0 %1349
        %v1351 = vsel %vm670, %v1340, %v1342
        %v1352 = vsel %vm670, %v1342, %v1344
        %v1353 = vsel %vm670, %v1346, %v1348
        %v1354 = vsel %vm670, %v1348, %v1350
        %v1361 = vadd.f32 %v1315, %v1340
        %v1362 = vadd.f32 %v1316, %v1351
        %v1363 = vadd.f32 %v1317, %v1352
        %v1364 = vadd.f32 %v1318, %v1346
        %v1365 = vadd.f32 %v1319, %v1353
        %v1366 = vadd.f32 %v1320, %v1354
        %v1367 = vmul.f32 %v1361, %v697
        %v1368 = vmul.f32 %v1362, %v701
        %v1369 = vmul.f32 %v1363, %v699
        %v1370 = vmul.f32 %v1364, %v697
        %v1371 = vmul.f32 %v1365, %v701
        %v1372 = vmul.f32 %v1366, %v699
        %v1373 = vmul.f32 %v1269, %v713
        %v1374 = vmul.f32 %v1270, %v713
        %v1375 = vmul.f32 %v1271, %v713
        %v1376 = vmul.f32 %v1272, %v717
        %v1377 = vmul.f32 %v1273, %v717
        %v1378 = vmul.f32 %v1274, %v717
        %v1379 = vmul.f32 %v1270, %v727
        %v1380 = vmul.f32 %v1271, %v727
        %v1381 = vmul.f32 %v1273, %v731
        %v1382 = vmul.f32 %v1274, %v731
        %1387 = vrot.lane.b32.xlu0 %v1379, 112
        %v1388 = vpop.permute.xlu0 %1387
        %1389 = vrot.lane.b32.xlu0 %v1380, 112
        %v1390 = vpop.permute.xlu0 %1389
        %1391 = vrot.lane.b32.xlu0 %v1381, 112
        %v1392 = vpop.permute.xlu0 %1391
        %1393 = vrot.lane.b32.xlu0 %v1382, 112
        %v1394 = vpop.permute.xlu0 %1393
        %v1395 = vsel %vm615, %v1388, %v1390
        %v1396 = vsel %vm615, %v1392, %v1394
        %v1403 = vadd.f32 %v1373, %v1388
        %v1404 = vadd.f32 %v1374, %v1395
        %v1405 = vadd.f32 %v1375, %v1390
        %v1406 = vadd.f32 %v1376, %v1392
        %v1407 = vadd.f32 %v1377, %v1396
        %v1408 = vadd.f32 %v1378, %v1394
        %v1409 = vmul.f32 %v1321, %v765
        %v1410 = vmul.f32 %v1322, %v765
        %v1411 = vmul.f32 %v1323, %v765
        %v1412 = vmul.f32 %v1324, %v769
        %v1413 = vmul.f32 %v1325, %v769
        %v1414 = vmul.f32 %v1326, %v769
        %1421 = vrot.lane.b32.xlu0 %v1409, 96
        %v1422 = vpop.permute.xlu0 %1421
        %1423 = vrot.lane.b32.xlu0 %v1410, 96
        %v1424 = vpop.permute.xlu0 %1423
        %1425 = vrot.lane.b32.xlu0 %v1411, 96
        %v1426 = vpop.permute.xlu0 %1425
        %1427 = vrot.lane.b32.xlu0 %v1412, 96
        %v1428 = vpop.permute.xlu0 %1427
        %1429 = vrot.lane.b32.xlu0 %v1413, 96
        %v1430 = vpop.permute.xlu0 %1429
        %1431 = vrot.lane.b32.xlu0 %v1414, 96
        %v1432 = vpop.permute.xlu0 %1431
        %v1433 = vsel %vm670, %v1422, %v1424
        %v1434 = vsel %vm670, %v1424, %v1426
        %v1435 = vsel %vm670, %v1428, %v1430
        %v1436 = vsel %vm670, %v1430, %v1432
        %v1443 = vadd.f32 %v1403, %v1422
        %v1444 = vadd.f32 %v1404, %v1433
        %v1445 = vadd.f32 %v1405, %v1434
        %v1446 = vadd.f32 %v1406, %v1428
        %v1447 = vadd.f32 %v1407, %v1435
        %v1448 = vadd.f32 %v1408, %v1436
        %1455 = vrot.lane.b32.xlu0 %v1443, 127
        %v1456 = vpop.permute.xlu0 %1455
        %1457 = vrot.lane.b32.xlu0 %v1444, 127
        %v1458 = vpop.permute.xlu0 %1457
        %1459 = vrot.lane.b32.xlu0 %v1445, 127
        %v1460 = vpop.permute.xlu0 %1459
        %1461 = vrot.lane.b32.xlu0 %v1446, 127
        %v1462 = vpop.permute.xlu0 %1461
        %1463 = vrot.lane.b32.xlu0 %v1447, 127
        %v1464 = vpop.permute.xlu0 %1463
        %1465 = vrot.lane.b32.xlu0 %v1448, 127
        %v1466 = vpop.permute.xlu0 %1465
        %v1467 = vsel %vm829, %v1456, %v1458
        %v1468 = vsel %vm829, %v1458, %v1460
        %v1469 = vsel %vm829, %v1462, %v1464
        %v1470 = vsel %vm829, %v1464, %v1466
        %v1477 = vadd.f32 %v1367, %v1467
        %v1478 = vadd.f32 %v1368, %v1468
        %v1479 = vadd.f32 %v1369, %v1460
        %v1480 = vadd.f32 %v1370, %v1469
        %v1481 = vadd.f32 %v1371, %v1470
        %v1482 = vadd.f32 %v1372, %v1466
        %v1483 = vmul.f32 %v1269, %v848
        %v1484 = vmul.f32 %v1270, %v848
        %v1485 = vmul.f32 %v1271, %v848
        %v1486 = vmul.f32 %v1272, %v852
        %v1487 = vmul.f32 %v1273, %v852
        %v1488 = vmul.f32 %v1274, %v852
        %v1489 = vmul.f32 %v1321, %v862
        %v1490 = vmul.f32 %v1322, %v862
        %v1491 = vmul.f32 %v1323, %v862
        %v1492 = vmul.f32 %v1324, %v866
        %v1493 = vmul.f32 %v1325, %v866
        %v1494 = vmul.f32 %v1326, %v866
        %1501 = vrot.lane.b32.xlu0 %v1489, 112
        %v1502 = vpop.permute.xlu0 %1501
        %1503 = vrot.lane.b32.xlu0 %v1490, 112
        %v1504 = vpop.permute.xlu0 %1503
        %1505 = vrot.lane.b32.xlu0 %v1491, 112
        %v1506 = vpop.permute.xlu0 %1505
        %1507 = vrot.lane.b32.xlu0 %v1492, 112
        %v1508 = vpop.permute.xlu0 %1507
        %1509 = vrot.lane.b32.xlu0 %v1493, 112
        %v1510 = vpop.permute.xlu0 %1509
        %1511 = vrot.lane.b32.xlu0 %v1494, 112
        %v1512 = vpop.permute.xlu0 %1511
        %v1513 = vsel %vm615, %v1502, %v1504
        %v1514 = vsel %vm615, %v1504, %v1506
        %v1515 = vsel %vm615, %v1508, %v1510
        %v1516 = vsel %vm615, %v1510, %v1512
        %v1523 = vadd.f32 %v1483, %v1502
        %v1524 = vadd.f32 %v1484, %v1513
        %v1525 = vadd.f32 %v1485, %v1514
        %v1526 = vadd.f32 %v1486, %v1508
        %v1527 = vadd.f32 %v1487, %v1515
        %v1528 = vadd.f32 %v1488, %v1516
        %v1529 = vmul.f32 %v1321, %v910
        %v1530 = vmul.f32 %v1322, %v910
        %v1531 = vmul.f32 %v1323, %v910
        %v1532 = vmul.f32 %v1324, %v914
        %v1533 = vmul.f32 %v1325, %v914
        %v1534 = vmul.f32 %v1326, %v914
        %1541 = vrot.lane.b32.xlu0 %v1529, 96
        %v1542 = vpop.permute.xlu0 %1541
        %1543 = vrot.lane.b32.xlu0 %v1530, 96
        %v1544 = vpop.permute.xlu0 %1543
        %1545 = vrot.lane.b32.xlu0 %v1531, 96
        %v1546 = vpop.permute.xlu0 %1545
        %1547 = vrot.lane.b32.xlu0 %v1532, 96
        %v1548 = vpop.permute.xlu0 %1547
        %1549 = vrot.lane.b32.xlu0 %v1533, 96
        %v1550 = vpop.permute.xlu0 %1549
        %1551 = vrot.lane.b32.xlu0 %v1534, 96
        %v1552 = vpop.permute.xlu0 %1551
        %v1553 = vsel %vm670, %v1542, %v1544
        %v1554 = vsel %vm670, %v1544, %v1546
        %v1555 = vsel %vm670, %v1548, %v1550
        %v1556 = vsel %vm670, %v1550, %v1552
        %v1563 = vadd.f32 %v1523, %v1542
        %v1564 = vadd.f32 %v1524, %v1553
        %v1565 = vadd.f32 %v1525, %v1554
        %v1566 = vadd.f32 %v1526, %v1548
        %v1567 = vadd.f32 %v1527, %v1555
        %v1568 = vadd.f32 %v1528, %v1556
        %v1569 = vmul.f32 %v1563, %v966
        %v1570 = vmul.f32 %v1564, %v970
        %v1571 = vmul.f32 %v1565, %v968
        %v1572 = vmul.f32 %v1566, %v966
        %v1573 = vmul.f32 %v1567, %v970
        %v1574 = vmul.f32 %v1568, %v968
        %1581 = vrot.lane.b32.xlu0 %v1569, 126
        %v1582 = vpop.permute.xlu0 %1581
        %1583 = vrot.lane.b32.xlu0 %v1570, 126
        %v1584 = vpop.permute.xlu0 %1583
        %1585 = vrot.lane.b32.xlu0 %v1571, 126
        %v1586 = vpop.permute.xlu0 %1585
        %1587 = vrot.lane.b32.xlu0 %v1572, 126
        %v1588 = vpop.permute.xlu0 %1587
        %1589 = vrot.lane.b32.xlu0 %v1573, 126
        %v1590 = vpop.permute.xlu0 %1589
        %1591 = vrot.lane.b32.xlu0 %v1574, 126
        %v1592 = vpop.permute.xlu0 %1591
        %v1593 = vsel %vm998, %v1582, %v1584
        %v1594 = vsel %vm998, %v1584, %v1586
        %v1595 = vsel %vm998, %v1588, %v1590
        %v1596 = vsel %vm998, %v1590, %v1592
        %v1603 = vadd.f32 %v1477, %v1593
        %v1604 = vadd.f32 %v1478, %v1594
        %v1605 = vadd.f32 %v1479, %v1586
        %v1606 = vadd.f32 %v1480, %v1595
        %v1607 = vadd.f32 %v1481, %v1596
        %v1608 = vadd.f32 %v1482, %v1592
        %v1609 = vmul.f32 %v1603, %v1018
        %v1610 = vmul.f32 %v1604, %v1018
        %v1611 = vmul.f32 %v1605, %v1018
        %v1612 = vmul.f32 %v1606, %v1023
        %v1613 = vmul.f32 %v1607, %v1023
        %v1614 = vmul.f32 %v1608, %v1023
        %v1615 = vadd.f32 %v1609, %v1034
        %v1616 = vadd.f32 %v1610, %v1034
        %v1617 = vadd.f32 %v1611, %v1034
        %v1618 = vadd.f32 %v1612, %v1039
        %v1619 = vadd.f32 %v1613, %v1039
        %v1620 = vadd.f32 %v1614, %v1039
        %v1621 = vmax.f32 %v1615, 0.0
        %v1622 = vmax.f32 %v1616, 0.0
        %v1623 = vmax.f32 %v1617, 0.0
        %v1624 = vmax.f32 %v1618, 0.0
        %v1625 = vmax.f32 %v1619, 0.0
        %v1626 = vmax.f32 %v1620, 0.0
        %1633 = vrot.lane.b32.xlu0 %v1621, 17
        %v1634 = vpop.permute.xlu0 %1633
        %1635 = vrot.lane.b32.xlu0 %v1622, 17
        %v1636 = vpop.permute.xlu0 %1635
        %1637 = vrot.lane.b32.xlu0 %v1623, 17
        %v1638 = vpop.permute.xlu0 %1637
        %1639 = vrot.lane.b32.xlu0 %v1624, 17
        %v1640 = vpop.permute.xlu0 %1639
        %1641 = vrot.lane.b32.xlu0 %v1625, 17
        %v1642 = vpop.permute.xlu0 %1641
        %1643 = vrot.lane.b32.xlu0 %v1626, 17
        %v1644 = vpop.permute.xlu0 %1643
        %v1645 = vsel %vm1071, %v1634, %v1636
        %v1646 = vsel %vm1071, %v1636, %v1638
        %v1647 = vsel %vm1071, %v1640, %v1642
        %v1648 = vsel %vm1071, %v1642, %v1644
        %1653 = vmatprep.subr.mxu0 %v1646
        %1654 = vmatpush1.msra.mxu0 %v1645
        %1655 = vmatprep.subr.mxu0 %v1648
        %1656 = vmatpush1.msra.mxu0 %v1647
        %1657 = vmatprep.subr.mxu0 0.0
        %1658 = vmatpush1.msra.mxu0 0.0
        %1659 = vmatprep.subr.mxu0 0.0
        %1660 = vmatpush1.msra.mxu0 0.0
        %1661 = vmatprep.subr.mxu0 0.0
        %1662 = vmatpush1.msra.mxu0 0.0
        %1663 = vmatprep.subr.mxu0 0.0
        %1664 = vmatpush1.msra.mxu0 0.0
        %1665 = vmatprep.subr.mxu0 0.0
        %1666 = vmatpush1.msra.mxu0 0.0
        %1667 = vmatprep.subr.mxu0 0.0
        %1668 = vmatpush1.msra.mxu0 0.0
        %1669 = vmatprep.subr.mxu0 0.0
        %1670 = vmatpush1.msra.mxu0 0.0
        %1671 = vmatprep.subr.mxu0 0.0
        %1672 = vmatpush1.msra.mxu0 0.0
        %1673 = vmatprep.subr.mxu0 0.0
        %1674 = vmatpush1.msra.mxu0 0.0
        %1675 = vmatprep.subr.mxu0 0.0
        %1676 = vmatpush1.msra.mxu0 0.0
        %1677 = vmatprep.subr.mxu0 0.0
        %1678 = vmatpush1.msra.mxu0 0.0
        %1679 = vmatprep.subr.mxu0 0.0
        %1680 = vmatpush1.msra.mxu0 0.0
        %1681 = vmatprep.subr.mxu0 0.0
        %1682 = vmatpush1.msra.mxu0 0.0
        %1683 = vmatprep.subr.mxu0 0.0
        %1684 = vmatpush1.msra.mxu0 0.0
        %1685 = vmatprep.subr.mxu0 0.0
        %1686 = vmatpush1.msra.mxu0 0.0
        %1687 = vmatprep.subr.mxu0 0.0
        %1688 = vmatpush1.msra.mxu0 0.0
        %1689 = vmatprep.subr.mxu0 0.0
        %1690 = vmatpush1.msra.mxu0 0.0
        %1691 = vmatprep.subr.mxu0 0.0
        %1692 = vmatpush1.msra.mxu0 0.0
        %1693 = vmatprep.subr.mxu0 0.0
        %1694 = vmatpush1.msra.mxu0 0.0
        %1695 = vmatprep.subr.mxu0 0.0
        %1696 = vmatpush1.msra.mxu0 0.0
        %1697 = vmatprep.subr.mxu0 0.0
        %1698 = vmatpush1.msra.mxu0 0.0
        %1699 = vmatprep.subr.mxu0 0.0
        %1700 = vmatpush1.msra.mxu0 0.0
        %1701 = vmatprep.subr.mxu0 0.0
        %1702 = vmatpush1.msra.mxu0 0.0
        %1703 = vmatprep.subr.mxu0 0.0
        %1704 = vmatpush1.msra.mxu0 0.0
        %1705 = vmatprep.subr.mxu0 0.0
        %1706 = vmatpush1.msra.mxu0 0.0
        %1707 = vmatprep.subr.mxu0 0.0
        %1708 = vmatpush1.msra.mxu0 0.0
        %1709 = vmatprep.subr.mxu0 0.0
        %1710 = vmatpush1.msra.mxu0 0.0
        %1711 = vmatprep.subr.mxu0 0.0
        %1712 = vmatpush1.msra.mxu0 0.0
        %1713 = vmatprep.subr.mxu0 0.0
        %1714 = vmatpush1.msra.mxu0 0.0
        %1715 = vmatprep.subr.mxu0 0.0
        %1716 = vmatpush1.msra.mxu0 0.0
        %1717 = vmatprep.mubr.f32.mxu0 0.0
        %1718 = vmatmul.mubr.f32.gmra.mrb[0].mxu0 %v1082
        %v1719 = vpop.f32.mrb[0].mxu0
        %v1720 = vadd.f32 0.0, %v1719
        %v1721 = vpop.f32.mrb[0].mxu0
        %v1722 = vadd.f32 0.0, %v1721
        %1723 = vdwg.mxu0
        %v1724 = vmul.f32 %v1720, %v1158
        %v1725 = vmul.f32 %v1722, %v1158
        %v1726 = vadd.f32 %v1724, %v1165
        %v1727 = vadd.f32 %v1725, %v1165
        %v1728 = vadd.f32 %v1726, %v1174
        %v1729 = vadd.f32 %v1727, %v1175
        %s1730 = scalar_lea.vmem %s409, 16 [#allocation3]
        %1731 = vst [vmem:[%s1730] sm:$0xff] %v1728
        %1732 = vst [vmem:[%s1730 + $0x8] sm:$0xff] %v1729
        %s1733 = sand.u32 %s291, 1
        %s1734 = scalar_lea.sflag [#allocation4], %s1733
        %s1735 = sand.u32 %s291, 1
        %s1736 = smul.addr %s1735, 32
        %s1737 = scalar_lea.vmem [#allocation3], %s1736
        // Predicated region
        $region69: #{tpu_custom_call.1} parent=67 // pred_check
          %p1738 = pneg %p301
        $region70: #{tpu_custom_call.1} parent=67 // pred_check_branch
          %1740 = sbr.rel (%p1738) target = $region72
        $region71: #{tpu_custom_call.1} parent=67 // pred_region
          %s1741 = smul.u32 2, %s26
          %s1743 = ssub.s32 512, 512
          %1744 = vsyncadd %s1734, %s1743
          %s1745 = smul.addr %s1741, 2
          %s1746 = smul.addr %s1745, 128
          %s1747 = scalar_lea.hbm %s12, %s1746
          %s1748 = sshll.u32 %s1737, 4
          %s1749 = int_to_ptr.vmem [resolvable:$true] %s1748
          %1754 = dma.vmem_to_hbm [thread:$0]  %s1749, 512, %s1747, %s1734, 256, 256, 16
        $region72: #{tpu_custom_call.1} parent=67 // pred_fallthru
          _
      $region68: #{tpu_custom_call.1} parent=5 // pred_fallthru
        _
      %p1755 = scmp.le.s32.totalorder 2, %s21
      // Predicated region
      $region73: #{tpu_custom_call.1} parent=5 // pred_check
        %p1756 = pneg %p1755
      $region74: #{tpu_custom_call.1} parent=5 // pred_check_branch
        %1758 = sbr.rel (%p1756) target = $region76
      $region75: #{tpu_custom_call.1} parent=5 // pred_region
        %s1759 = ssub.s32 %s21, 2
        // Predicated region
        $region77: #{tpu_custom_call.1} parent=75 // pred_check
          %p1760 = pneg %p307
        $region78: #{tpu_custom_call.1} parent=75 // pred_check_branch
          %1762 = sbr.rel (%p1760) target = $region80
        $region79: #{tpu_custom_call.1} parent=75 // pred_region
          %s1763 = sand.u32 %s292, 1
          %s1764 = scalar_lea.sflag [#allocation4], %s1763
          %s1765 = sand.u32 %s292, 1
          %s1766 = smul.addr %s1765, 32
          %s1767 = scalar_lea.vmem [#allocation3], %s1766
          %1768 = dma.done %s1764, 512
        $region80: #{tpu_custom_call.1} parent=75 // pred_fallthru
          _
      $region76: #{tpu_custom_call.1} parent=5 // pred_fallthru
        _
    $region6: #{tpu_custom_call.1} parent=1 // loop_footer
      %s25 = sadd.s32 1, %s21
    $region7: #{tpu_custom_call.1} parent=1 // loop_footer_branch
      %20 = sbr.rel target = $region3
    $region8: #{tpu_custom_call.1} parent=1 // loop_exit
      _
    %1769 = vsyncpa [#allocation4], 1
    %s1770 = scalar_lea.sflag [#allocation4], 1
    %1771 = vsyncpa %s1770, 1

</llo_original>
